<compile_context>
chip_gen: v7x
topology: tpu7x:2x2x1
jax: 0.10.0
libtpu: 0.0.40
codegen_flags: <defaults>
</compile_context>

<pallas_src>
import jax
import jax.numpy as jnp
from jax import lax
from jax.experimental import pallas as pl
from jax.experimental.pallas import tpu as pltpu


_VMEM = pl.BlockSpec(memory_space=pltpu.MemorySpace.VMEM)


# ------------------------------- packing helpers --------------------------------


def _round8(n):
    return -(-n // 8) * 8


def _pack_slab(named_mats):
    """Pack 2-D f32 matrices into one slab (per-block rows padded to 8, shared width).

    Returns (slab, layout) with layout[name] = (row_offset, rows, cols); the
    offsets are static Python ints, so the kernel slices them as free ref views.
    """
    width = max(int(m.shape[1]) for _, m in named_mats)
    blocks, layout, off = [], {}, 0
    for name, m in named_mats:
        r, c = int(m.shape[0]), int(m.shape[1])
        rp = _round8(r)
        blk = jnp.zeros((rp, width), jnp.float32).at[:r, :c].set(m.astype(jnp.float32))
        blocks.append(blk)
        layout[name] = (off, r, c)
        off += rp
    return jnp.concatenate(blocks, axis=0), layout


def _block_mean_matrix(B, N, total_cols, col_offset, scale):
    """(B, total_cols) 0/scale matrix: row b averages the b-th contiguous N-row block."""
    r = jnp.arange(B, dtype=jnp.int32)[:, None]
    c = jnp.arange(total_cols, dtype=jnp.int32)[None, :]
    in_blk = (c >= col_offset + r * N) & (c < col_offset + (r + 1) * N)
    return in_blk.astype(jnp.float32) * scale


def _expand_matrix(B, Nt):
    """(B*Nt, B) 0/1 matrix repeating each batch row Nt times (z broadcast via MXU)."""
    r = jnp.arange(B * Nt, dtype=jnp.int32)[:, None]
    b = jnp.arange(B, dtype=jnp.int32)[None, :]
    return (r // Nt == b).astype(jnp.float32)


# ----------------------------- fused Pallas kernel ------------------------------


def _make_fused_kernel(B, Nt, Nc, x_dim, y_dim, r_dim, z_dim, h_dim,
                       w_layout, aux_layout, training):
    """Builds the fused NeuralProcess.forward kernel body (single VMEM block)."""
    f32 = jnp.float32
    n_dec_rows = B * Nt

    def kernel(x_ref, y_ref, w_ref, aux_ref, *out_refs):
        if training:
            lat_ref, y_out_ref = out_refs
        else:
            (y_out_ref,) = out_refs

        def view(ref, layout, name):            # static slice -> zero-cost ref view
            off, r, c = layout[name]
            return ref[off:off + r, :c]

        def W(name):
            return view(w_ref, w_layout, name)

        def A(name):
            return view(aux_ref, aux_layout, name)

        def relu(v):
            return jnp.maximum(v, 0.0)

        def mm(a, b):
            return jnp.dot(a, b, preferred_element_type=f32)

        # ----- latent encoder over the (stacked) point set -----------------------
        if training:
            x_enc = x_ref[...]                              # (B*(Nt+Nc), x)  target|context
            y_enc = y_ref[...]                              # (B*(Nt+Nc), y)
        else:
            x_enc = x_ref[n_dec_rows:n_dec_rows + B * Nc, :]  # context rows only
            y_enc = y_ref[...]                              # (B*Nc, y)

        h = relu(mm(x_enc, W("w1x")) + mm(y_enc, W("w1y")) + W("b1"))
        h = relu(mm(h, W("w2")) + W("b2"))
        r_i = mm(h, W("w3")) + W("b3")                      # (rows, r_dim)

        # mean over points = precomputed block-diagonal averaging matmul (MXU)
        r = mm(A("avg"), r_i)                               # train: (2B, r)  eval: (B, r)

        # MuSigmaEncoder with fused [mu | sigma] head
        hid = relu(mm(r, W("wr")) + W("br"))
        ms = mm(hid, W("wms")) + W("bms")                   # (., 2*z)
        sig_full = 0.1 + 0.9 * jax.nn.sigmoid(ms)

        if training:
            col = lax.broadcasted_iota(jnp.int32, ms.shape, 1)
            lat_ref[...] = jnp.where(col < z_dim, ms, sig_full)   # [mu | sigma]

        # reparameterized sample: q_target (train, rows :B) / q_context (eval)
        z = ms[:B, :z_dim] + sig_full[:B, z_dim:] * A("eps")      # (B, z)

        # ----- decoder over target points ----------------------------------------
        zp = mm(z, W("wd1z"))                               # (B, h)   z projected once/row
        zp_rep = mm(A("expand"), zp)                        # (B*Nt, h) broadcast via MXU
        xt = x_ref[:n_dec_rows, :]

        hd = relu(mm(xt, W("wd1x")) + zp_rep + W("bd1"))
        hd = relu(mm(hd, W("wd2")) + W("bd2"))
        hd = relu(mm(hd, W("wd3")) + W("bd3"))
        out = mm(hd, W("wdh")) + W("bdh")                   # (B*Nt, 2*y)
        sig_y = 0.1 + 0.9 * jax.nn.softplus(out)
        ycol = lax.broadcasted_iota(jnp.int32, out.shape, 1)
        y_out_ref[...] = jnp.where(ycol < y_dim, out, sig_y)      # [mu | sigma]

    return kernel


# ---------------------------------- parameters -----------------------------------


def _init_linear(key, fan_in, fan_out):
    """PyTorch-like Linear init; weight stored (in, out), bias (1, out)."""
    kw, kb = jax.random.split(key)
    bound = 1.0 / (fan_in ** 0.5)
    w = jax.random.uniform(kw, (fan_in, fan_out), jnp.float32, -bound, bound)
    b = jax.random.uniform(kb, (1, fan_out), jnp.float32, -bound, bound)
    return w, b


def init_neural_process(key, x_dim, y_dim, r_dim, z_dim, h_dim):
    keys = jax.random.split(key, 9)
    # Encoder: Linear(x+y,h) ReLU Linear(h,h) ReLU Linear(h,r); first layer split x/y.
    w1, b1 = _init_linear(keys[0], x_dim + y_dim, h_dim)
    w2, b2 = _init_linear(keys[1], h_dim, h_dim)
    w3, b3 = _init_linear(keys[2], h_dim, r_dim)
    # MuSigmaEncoder: Linear(r,r) ReLU ; mu/sigma heads fused into one (r, 2z) matmul.
    wr, br = _init_linear(keys[3], r_dim, r_dim)
    wms, bms = _init_linear(keys[4], r_dim, 2 * z_dim)
    # Decoder: Linear(x+z,h) ReLU Linear(h,h) ReLU Linear(h,h) ReLU ; fused (h, 2y) head.
    wd1, bd1 = _init_linear(keys[5], x_dim + z_dim, h_dim)
    wd2, bd2 = _init_linear(keys[6], h_dim, h_dim)
    wd3, bd3 = _init_linear(keys[7], h_dim, h_dim)
    wdh, bdh = _init_linear(keys[8], h_dim, 2 * y_dim)

    named = [
        ("w1x", w1[:x_dim]), ("w1y", w1[x_dim:]), ("b1", b1),
        ("w2", w2), ("b2", b2), ("w3", w3), ("b3", b3),
        ("wr", wr), ("br", br), ("wms", wms), ("bms", bms),
        ("wd1x", wd1[:x_dim]), ("wd1z", wd1[x_dim:]), ("bd1", bd1),
        ("wd2", wd2), ("bd2", bd2), ("wd3", wd3), ("bd3", bd3),
        ("wdh", wdh), ("bdh", bdh),
    ]
    w_slab, w_layout = _pack_slab(named)   # packed ONCE; reused by every forward
    return {"w_slab": w_slab, "w_layout": w_layout,
            "dims": (x_dim, y_dim, r_dim, z_dim, h_dim)}


# ---------------------------------- JAX wrapper -----------------------------------


def neural_process_forward(params, x_context, y_context, x_target,
                           y_target=None, training=False, key=None):
    """Mirrors NeuralProcess.forward; Normal distributions returned as (mu, sigma)."""
    x_dim, y_dim, r_dim, z_dim, h_dim = params["dims"]
    B, Nt, _ = x_target.shape
    _, Nc, _ = x_context.shape
    if key is None:
        key = jax.random.PRNGKey(0)

    xt = x_target.reshape(B * Nt, x_dim).astype(jnp.float32)
    xc = x_context.reshape(B * Nc, x_dim).astype(jnp.float32)
    yc = y_context.reshape(B * Nc, y_dim).astype(jnp.float32)
    x_all = jnp.concatenate([xt, xc], axis=0)               # target rows | context rows

    eps = jax.random.normal(key, (B, z_dim), jnp.float32)    # reparameterization noise
    expand = _expand_matrix(B, Nt)

    if training:
        yt = y_target.reshape(B * Nt, y_dim).astype(jnp.float32)
        y_in = jnp.concatenate([yt, yc], axis=0)
        R = B * (Nt + Nc)
        avg = jnp.concatenate(
            [_block_mean_matrix(B, Nt, R, 0, 1.0 / Nt),          # r_target rows
             _block_mean_matrix(B, Nc, R, B * Nt, 1.0 / Nc)],    # r_context rows
            axis=0)                                              # (2B, R)
    else:
        y_in = yc
        avg = _block_mean_matrix(B, Nc, B * Nc, 0, 1.0 / Nc)     # (B, B*Nc)

    aux_slab, aux_layout = _pack_slab(
        [("avg", avg), ("expand", expand), ("eps", eps)])

    kernel = _make_fused_kernel(B, Nt, Nc, x_dim, y_dim, r_dim, z_dim, h_dim,
                                params["w_layout"], aux_layout, training)
    inputs = (x_all, y_in, params["w_slab"], aux_slab)

    if training:
        lat, y_out = pl.pallas_call(
            kernel,
            out_shape=(jax.ShapeDtypeStruct((2 * B, 2 * z_dim), jnp.float32),
                       jax.ShapeDtypeStruct((B * Nt, 2 * y_dim), jnp.float32)),
            in_specs=[_VMEM] * len(inputs),
            out_specs=(_VMEM, _VMEM),
        )(*inputs)
        y_mu = y_out[:, :y_dim].reshape(B, Nt, y_dim)
        y_sigma = y_out[:, y_dim:].reshape(B, Nt, y_dim)
        mu_t, sig_t = lat[:B, :z_dim], lat[:B, z_dim:]
        mu_c, sig_c = lat[B:, :z_dim], lat[B:, z_dim:]
        return (y_mu, y_sigma), (mu_t, sig_t), (mu_c, sig_c)
    else:
        y_out = pl.pallas_call(
            kernel,
            out_shape=jax.ShapeDtypeStruct((B * Nt, 2 * y_dim), jnp.float32),
            in_specs=[_VMEM] * len(inputs),
            out_specs=_VMEM,
        )(*inputs)
        y_mu = y_out[:, :y_dim].reshape(B, Nt, y_dim)
        y_sigma = y_out[:, y_dim:].reshape(B, Nt, y_dim)
        return (y_mu, y_sigma)


# -------------------------------------- main ---------------------------------------

if __name__ == "__main__":
    x_dim, y_dim, r_dim, z_dim, h_dim = 2, 2, 32, 32, 32
    B, num_context, num_target = 2, 8, 16

    root = jax.random.PRNGKey(0)
    k_param, k_xt, k_yt, k_samp = jax.random.split(root, 4)

    params = init_neural_process(k_param, x_dim, y_dim, r_dim, z_dim, h_dim)

    x_target = jax.random.normal(k_xt, (B, num_target, x_dim), jnp.float32)
    y_target = jax.random.normal(k_yt, (B, num_target, y_dim), jnp.float32)
    # context is a subset of target (convention from the paper)
    x_context = x_target[:, :num_context, :]
    y_context = y_target[:, :num_context, :]

    # eval-mode forward (self.training == False)
    y_mu, y_sigma = neural_process_forward(
        params, x_context, y_context, x_target, training=False, key=k_samp)
    jax.block_until_ready((y_mu, y_sigma))
    assert y_mu.shape == (B, num_target, y_dim) and y_sigma.shape == (B, num_target, y_dim)
    assert bool(jnp.all(y_sigma > 0.1))

    # training-mode forward (self.training == True)
    (p_mu, p_sigma), (mu_t, sig_t), (mu_c, sig_c) = neural_process_forward(
        params, x_context, y_context, x_target, y_target, training=True, key=k_samp)
    jax.block_until_ready((p_mu, p_sigma, mu_t, sig_t, mu_c, sig_c))
    assert mu_t.shape == (B, z_dim) and sig_c.shape == (B, z_dim)
    assert bool(jnp.all(sig_t > 0.1)) and bool(jnp.all(sig_c > 0.1))
    assert bool(jnp.all(p_sigma > 0.1))

    print("KERNEL_OK")
</pallas_src>

<mosaic_0001>
module attributes {stable_mosaic.version = 11 : i64} {
  func.func @kernel(%arg0: memref<48x2xf32, #tpu.memory_space<vmem>>, %arg1: memref<16x2xf32, #tpu.memory_space<vmem>>, %arg2: memref<352x64xf32, #tpu.memory_space<vmem>>, %arg3: memref<48x32xf32, #tpu.memory_space<vmem>>, %arg4: memref<32x4xf32, #tpu.memory_space<vmem>>) attributes {dimension_semantics = [], scalar_prefetch = 0 : i64, scratch_operands = 0 : i64, tpu.core_type = #tpu.core_type<tc>} {
    %c32 = arith.constant 32 : index
    %c0 = arith.constant 0 : index
    %0 = vector.load %arg0[%c32, %c0] : memref<48x2xf32, #tpu.memory_space<vmem>>, vector<16x2xf32>
    %c0_0 = arith.constant 0 : index
    %c0_1 = arith.constant 0 : index
    %1 = vector.load %arg1[%c0_0, %c0_1] : memref<16x2xf32, #tpu.memory_space<vmem>>, vector<16x2xf32>
    %c0_2 = arith.constant 0 : index
    %c0_3 = arith.constant 0 : index
    %2 = vector.load %arg2[%c0_2, %c0_3] : memref<352x64xf32, #tpu.memory_space<vmem>>, vector<2x32xf32>
    %cst = arith.constant dense<0.000000e+00> : vector<16x32xf32>
    %3 = tpu.matmul %0, %2, %cst {dimension_numbers = #tpu.dot_dimension_numbers<[1], [0], [0], [1], [0, 0, 1, 1], [], []>} : vector<16x2xf32>, vector<2x32xf32>, vector<16x32xf32> -> vector<16x32xf32>
    %c8 = arith.constant 8 : index
    %c0_4 = arith.constant 0 : index
    %4 = vector.load %arg2[%c8, %c0_4] : memref<352x64xf32, #tpu.memory_space<vmem>>, vector<2x32xf32>
    %cst_5 = arith.constant dense<0.000000e+00> : vector<16x32xf32>
    %5 = tpu.matmul %1, %4, %cst_5 {dimension_numbers = #tpu.dot_dimension_numbers<[1], [0], [0], [1], [0, 0, 1, 1], [], []>} : vector<16x2xf32>, vector<2x32xf32>, vector<16x32xf32> -> vector<16x32xf32>
    %6 = arith.addf %3, %5 : vector<16x32xf32>
    %c16 = arith.constant 16 : index
    %c0_6 = arith.constant 0 : index
    %7 = vector.load %arg2[%c16, %c0_6] : memref<352x64xf32, #tpu.memory_space<vmem>>, vector<1x32xf32>
    %8 = vector.broadcast %7 : vector<1x32xf32> to vector<16x32xf32>
    %9 = arith.addf %6, %8 : vector<16x32xf32>
    %cst_7 = arith.constant 0.000000e+00 : f32
    %10 = vector.broadcast %cst_7 : f32 to vector<16x32xf32>
    %11 = arith.maximumf %9, %10 : vector<16x32xf32>
    %c24 = arith.constant 24 : index
    %c0_8 = arith.constant 0 : index
    %12 = vector.load %arg2[%c24, %c0_8] : memref<352x64xf32, #tpu.memory_space<vmem>>, vector<32x32xf32>
    %cst_9 = arith.constant dense<0.000000e+00> : vector<16x32xf32>
    %13 = tpu.matmul %11, %12, %cst_9 {dimension_numbers = #tpu.dot_dimension_numbers<[1], [0], [0], [1], [0, 0, 1, 1], [], []>} : vector<16x32xf32>, vector<32x32xf32>, vector<16x32xf32> -> vector<16x32xf32>
    %c56 = arith.constant 56 : index
    %c0_10 = arith.constant 0 : index
    %14 = vector.load %arg2[%c56, %c0_10] : memref<352x64xf32, #tpu.memory_space<vmem>>, vector<1x32xf32>
    %15 = vector.broadcast %14 : vector<1x32xf32> to vector<16x32xf32>
    %16 = arith.addf %13, %15 : vector<16x32xf32>
    %cst_11 = arith.constant 0.000000e+00 : f32
    %17 = vector.broadcast %cst_11 : f32 to vector<16x32xf32>
    %18 = arith.maximumf %16, %17 : vector<16x32xf32>
    %c64 = arith.constant 64 : index
    %c0_12 = arith.constant 0 : index
    %19 = vector.load %arg2[%c64, %c0_12] : memref<352x64xf32, #tpu.memory_space<vmem>>, vector<32x32xf32>
    %cst_13 = arith.constant dense<0.000000e+00> : vector<16x32xf32>
    %20 = tpu.matmul %18, %19, %cst_13 {dimension_numbers = #tpu.dot_dimension_numbers<[1], [0], [0], [1], [0, 0, 1, 1], [], []>} : vector<16x32xf32>, vector<32x32xf32>, vector<16x32xf32> -> vector<16x32xf32>
    %c96 = arith.constant 96 : index
    %c0_14 = arith.constant 0 : index
    %21 = vector.load %arg2[%c96, %c0_14] : memref<352x64xf32, #tpu.memory_space<vmem>>, vector<1x32xf32>
    %22 = vector.broadcast %21 : vector<1x32xf32> to vector<16x32xf32>
    %23 = arith.addf %20, %22 : vector<16x32xf32>
    %c0_15 = arith.constant 0 : index
    %c0_16 = arith.constant 0 : index
    %24 = vector.load %arg3[%c0_15, %c0_16] : memref<48x32xf32, #tpu.memory_space<vmem>>, vector<2x16xf32>
    %cst_17 = arith.constant dense<0.000000e+00> : vector<2x32xf32>
    %25 = tpu.matmul %24, %23, %cst_17 {dimension_numbers = #tpu.dot_dimension_numbers<[1], [0], [0], [1], [0, 0, 1, 1], [], []>} : vector<2x16xf32>, vector<16x32xf32>, vector<2x32xf32> -> vector<2x32xf32>
    %c104 = arith.constant 104 : index
    %c0_18 = arith.constant 0 : index
    %26 = vector.load %arg2[%c104, %c0_18] : memref<352x64xf32, #tpu.memory_space<vmem>>, vector<32x32xf32>
    %cst_19 = arith.constant dense<0.000000e+00> : vector<2x32xf32>
    %27 = tpu.matmul %25, %26, %cst_19 {dimension_numbers = #tpu.dot_dimension_numbers<[1], [0], [0], [1], [0, 0, 1, 1], [], []>} : vector<2x32xf32>, vector<32x32xf32>, vector<2x32xf32> -> vector<2x32xf32>
    %c136 = arith.constant 136 : index
    %c0_20 = arith.constant 0 : index
    %28 = vector.load %arg2[%c136, %c0_20] : memref<352x64xf32, #tpu.memory_space<vmem>>, vector<1x32xf32>
    %29 = vector.broadcast %28 : vector<1x32xf32> to vector<2x32xf32>
    %30 = arith.addf %27, %29 : vector<2x32xf32>
    %cst_21 = arith.constant 0.000000e+00 : f32
    %31 = vector.broadcast %cst_21 : f32 to vector<2x32xf32>
    %32 = arith.maximumf %30, %31 : vector<2x32xf32>
    %c144 = arith.constant 144 : index
    %c0_22 = arith.constant 0 : index
    %33 = vector.load %arg2[%c144, %c0_22] : memref<352x64xf32, #tpu.memory_space<vmem>>, vector<32x64xf32>
    %cst_23 = arith.constant dense<0.000000e+00> : vector<2x64xf32>
    %34 = tpu.matmul %32, %33, %cst_23 {dimension_numbers = #tpu.dot_dimension_numbers<[1], [0], [0], [1], [0, 0, 1, 1], [], []>} : vector<2x32xf32>, vector<32x64xf32>, vector<2x64xf32> -> vector<2x64xf32>
    %c176 = arith.constant 176 : index
    %c0_24 = arith.constant 0 : index
    %35 = vector.load %arg2[%c176, %c0_24] : memref<352x64xf32, #tpu.memory_space<vmem>>, vector<1x64xf32>
    %36 = vector.broadcast %35 : vector<1x64xf32> to vector<2x64xf32>
    %37 = arith.addf %34, %36 : vector<2x64xf32>
    %38 = arith.negf %37 : vector<2x64xf32>
    %39 = math.exp %38 : vector<2x64xf32>
    %cst_25 = arith.constant 1.000000e+00 : f32
    %40 = vector.broadcast %cst_25 : f32 to vector<2x64xf32>
    %41 = arith.addf %40, %39 : vector<2x64xf32>
    %42 = arith.divf %40, %41 : vector<2x64xf32>
    %cst_26 = arith.constant 0.899999976 : f32
    %43 = vector.broadcast %cst_26 : f32 to vector<2x64xf32>
    %44 = arith.mulf %43, %42 : vector<2x64xf32>
    %cst_27 = arith.constant 1.000000e-01 : f32
    %45 = vector.broadcast %cst_27 : f32 to vector<2x64xf32>
    %46 = arith.addf %45, %44 : vector<2x64xf32>
    %47 = vector.extract_strided_slice %37 {offsets = [0, 0], sizes = [2, 32], strides = [1, 1]} : vector<2x64xf32> to vector<2x32xf32>
    %48 = vector.extract_strided_slice %46 {offsets = [0, 32], sizes = [2, 32], strides = [1, 1]} : vector<2x64xf32> to vector<2x32xf32>
    %c40 = arith.constant 40 : index
    %c0_28 = arith.constant 0 : index
    %49 = vector.load %arg3[%c40, %c0_28] : memref<48x32xf32, #tpu.memory_space<vmem>>, vector<2x32xf32>
    %50 = arith.mulf %48, %49 : vector<2x32xf32>
    %51 = arith.addf %47, %50 : vector<2x32xf32>
    %c192 = arith.constant 192 : index
    %c0_29 = arith.constant 0 : index
    %52 = vector.load %arg2[%c192, %c0_29] : memref<352x64xf32, #tpu.memory_space<vmem>>, vector<32x32xf32>
    %cst_30 = arith.constant dense<0.000000e+00> : vector<2x32xf32>
    %53 = tpu.matmul %51, %52, %cst_30 {dimension_numbers = #tpu.dot_dimension_numbers<[1], [0], [0], [1], [0, 0, 1, 1], [], []>} : vector<2x32xf32>, vector<32x32xf32>, vector<2x32xf32> -> vector<2x32xf32>
    %c8_31 = arith.constant 8 : index
    %c0_32 = arith.constant 0 : index
    %54 = vector.load %arg3[%c8_31, %c0_32] : memref<48x32xf32, #tpu.memory_space<vmem>>, vector<32x2xf32>
    %cst_33 = arith.constant dense<0.000000e+00> : vector<32x32xf32>
    %55 = tpu.matmul %54, %53, %cst_33 {dimension_numbers = #tpu.dot_dimension_numbers<[1], [0], [0], [1], [0, 0, 1, 1], [], []>} : vector<32x2xf32>, vector<2x32xf32>, vector<32x32xf32> -> vector<32x32xf32>
    %c0_34 = arith.constant 0 : index
    %c0_35 = arith.constant 0 : index
    %56 = vector.load %arg0[%c0_34, %c0_35] : memref<48x2xf32, #tpu.memory_space<vmem>>, vector<32x2xf32>
    %c184 = arith.constant 184 : index
    %c0_36 = arith.constant 0 : index
    %57 = vector.load %arg2[%c184, %c0_36] : memref<352x64xf32, #tpu.memory_space<vmem>>, vector<2x32xf32>
    %cst_37 = arith.constant dense<0.000000e+00> : vector<32x32xf32>
    %58 = tpu.matmul %56, %57, %cst_37 {dimension_numbers = #tpu.dot_dimension_numbers<[1], [0], [0], [1], [0, 0, 1, 1], [], []>} : vector<32x2xf32>, vector<2x32xf32>, vector<32x32xf32> -> vector<32x32xf32>
    %59 = arith.addf %58, %55 : vector<32x32xf32>
    %c224 = arith.constant 224 : index
    %c0_38 = arith.constant 0 : index
    %60 = vector.load %arg2[%c224, %c0_38] : memref<352x64xf32, #tpu.memory_space<vmem>>, vector<1x32xf32>
    %61 = vector.broadcast %60 : vector<1x32xf32> to vector<32x32xf32>
    %62 = arith.addf %59, %61 : vector<32x32xf32>
    %cst_39 = arith.constant 0.000000e+00 : f32
    %63 = vector.broadcast %cst_39 : f32 to vector<32x32xf32>
    %64 = arith.maximumf %62, %63 : vector<32x32xf32>
    %c232 = arith.constant 232 : index
    %c0_40 = arith.constant 0 : index
    %65 = vector.load %arg2[%c232, %c0_40] : memref<352x64xf32, #tpu.memory_space<vmem>>, vector<32x32xf32>
    %cst_41 = arith.constant dense<0.000000e+00> : vector<32x32xf32>
    %66 = tpu.matmul %64, %65, %cst_41 {dimension_numbers = #tpu.dot_dimension_numbers<[1], [0], [0], [1], [0, 0, 1, 1], [], []>} : vector<32x32xf32>, vector<32x32xf32>, vector<32x32xf32> -> vector<32x32xf32>
    %c264 = arith.constant 264 : index
    %c0_42 = arith.constant 0 : index
    %67 = vector.load %arg2[%c264, %c0_42] : memref<352x64xf32, #tpu.memory_space<vmem>>, vector<1x32xf32>
    %68 = vector.broadcast %67 : vector<1x32xf32> to vector<32x32xf32>
    %69 = arith.addf %66, %68 : vector<32x32xf32>
    %cst_43 = arith.constant 0.000000e+00 : f32
    %70 = vector.broadcast %cst_43 : f32 to vector<32x32xf32>
    %71 = arith.maximumf %69, %70 : vector<32x32xf32>
    %c272 = arith.constant 272 : index
    %c0_44 = arith.constant 0 : index
    %72 = vector.load %arg2[%c272, %c0_44] : memref<352x64xf32, #tpu.memory_space<vmem>>, vector<32x32xf32>
    %cst_45 = arith.constant dense<0.000000e+00> : vector<32x32xf32>
    %73 = tpu.matmul %71, %72, %cst_45 {dimension_numbers = #tpu.dot_dimension_numbers<[1], [0], [0], [1], [0, 0, 1, 1], [], []>} : vector<32x32xf32>, vector<32x32xf32>, vector<32x32xf32> -> vector<32x32xf32>
    %c304 = arith.constant 304 : index
    %c0_46 = arith.constant 0 : index
    %74 = vector.load %arg2[%c304, %c0_46] : memref<352x64xf32, #tpu.memory_space<vmem>>, vector<1x32xf32>
    %75 = vector.broadcast %74 : vector<1x32xf32> to vector<32x32xf32>
    %76 = arith.addf %73, %75 : vector<32x32xf32>
    %cst_47 = arith.constant 0.000000e+00 : f32
    %77 = vector.broadcast %cst_47 : f32 to vector<32x32xf32>
    %78 = arith.maximumf %76, %77 : vector<32x32xf32>
    %c312 = arith.constant 312 : index
    %c0_48 = arith.constant 0 : index
    %79 = vector.load %arg2[%c312, %c0_48] : memref<352x64xf32, #tpu.memory_space<vmem>>, vector<32x4xf32>
    %cst_49 = arith.constant dense<0.000000e+00> : vector<32x4xf32>
    %80 = tpu.matmul %78, %79, %cst_49 {dimension_numbers = #tpu.dot_dimension_numbers<[1], [0], [0], [1], [0, 0, 1, 1], [], []>} : vector<32x32xf32>, vector<32x4xf32>, vector<32x4xf32> -> vector<32x4xf32>
    %c344 = arith.constant 344 : index
    %c0_50 = arith.constant 0 : index
    %81 = vector.load %arg2[%c344, %c0_50] : memref<352x64xf32, #tpu.memory_space<vmem>>, vector<1x4xf32>
    %82 = vector.broadcast %81 : vector<1x4xf32> to vector<32x4xf32>
    %83 = arith.addf %80, %82 : vector<32x4xf32>
    %cst_51 = arith.constant 0.000000e+00 : f32
    %84 = vector.broadcast %cst_51 : f32 to vector<32x4xf32>
    %85 = arith.maximumf %83, %84 : vector<32x4xf32>
    %86 = vector.broadcast %cst_51 : f32 to vector<32x4xf32>
    %87 = arith.subf %83, %86 : vector<32x4xf32>
    %88 = arith.cmpf one, %87, %87 : vector<32x4xf32>
    %89 = vector.broadcast %cst_51 : f32 to vector<32x4xf32>
    %90 = arith.addf %83, %89 : vector<32x4xf32>
    %91 = math.absf %87 : vector<32x4xf32>
    %cst_52 = arith.constant 0.000000e+00 : f32
    %92 = vector.broadcast %cst_52 : f32 to vector<32x4xf32>
    %93 = arith.subf %92, %91 : vector<32x4xf32>
    %94 = math.exp %93 : vector<32x4xf32>
    %95 = math.log1p %94 : vector<32x4xf32>
    %96 = arith.addf %85, %95 : vector<32x4xf32>
    %97 = arith.select %88, %90, %96 : vector<32x4xi1>, vector<32x4xf32>
    %cst_53 = arith.constant 0.899999976 : f32
    %98 = vector.broadcast %cst_53 : f32 to vector<32x4xf32>
    %99 = arith.mulf %98, %97 : vector<32x4xf32>
    %cst_54 = arith.constant 1.000000e-01 : f32
    %100 = vector.broadcast %cst_54 : f32 to vector<32x4xf32>
    %101 = arith.addf %100, %99 : vector<32x4xf32>
    %102 = tpu.iota {dimensions = array<i32: 1>} : vector<32x4xi32>
    %c2_i32 = arith.constant 2 : i32
    %103 = vector.broadcast %c2_i32 : i32 to vector<32x4xi32>
    %104 = arith.cmpi slt, %102, %103 : vector<32x4xi32>
    %105 = arith.select %104, %83, %101 : vector<32x4xi1>, vector<32x4xf32>
    %c0_55 = arith.constant 0 : index
    %c0_56 = arith.constant 0 : index
    %106 = vector.load %arg4[%c0_55, %c0_56] : memref<32x4xf32, #tpu.memory_space<vmem>>, vector<32x4xf32>
    tpu.vector_store %arg4[%c0_55, %c0_56], %105 {strides = array<i32>} : memref<32x4xf32, #tpu.memory_space<vmem>>, vector<32x4xf32>,
    return
  }
}

</mosaic_0001>

<llo_original>
// kernel: tpu_custom_call.1
$region0: #{tpu_custom_call.1}
  #allocation0 [shape = 'u32[]', space=smem, size = 0x4, offset = 0x4, fixed_abs, tag = 'smem constant byte address 0x4 - core index']
  #allocation1 [shape = 'u32[144,128]{1,0:T(1,128)}', space=vmem, size = 0x12000, scoped, tag = 'internal scratch']
  %s0 = inlined_call_operand.vmem [shape: f32[48,2], index: 0, kind: input, shape index: {}]
  %s1 = inlined_call_operand.vmem [shape: f32[16,2], index: 1, kind: input, shape index: {}]
  %s2 = inlined_call_operand.vmem [shape: f32[352,64], index: 2, kind: input, shape index: {}]
  %s3 = inlined_call_operand.vmem [shape: f32[48,32], index: 3, kind: input, shape index: {}]
  %s4 = inlined_call_operand.vmem [shape: f32[32,4], index: 4, kind: output, shape index: {}]
  %s5 = sld [smem:[#allocation0]]
  $region26: #{tpu_custom_call.1} parent=0
    _
  %s7 = ssub.s32 1, %s5
  %s8 = scalar_select 0, %s7, %s5
  // Predicated region
  $region2: #{tpu_custom_call.1} parent=0 // pred_check
    _
  $region3: #{tpu_custom_call.1} parent=0 // pred_check_branch
    %10 = sbr.rel (0) target = $region5
  $region4: #{tpu_custom_call.1} parent=0 // pred_region
    _
  $region5: #{tpu_custom_call.1} parent=0 // pred_fallthru
    _
  // Predicated region
  $region6: #{tpu_custom_call.1} parent=0 // pred_check
    _
  $region7: #{tpu_custom_call.1} parent=0 // pred_check_branch
    %12 = sbr.rel (0) target = $region9
  $region8: #{tpu_custom_call.1} parent=0 // pred_region
    _
  $region9: #{tpu_custom_call.1} parent=0 // pred_fallthru
    _
  // Predicated region
  $region10: #{tpu_custom_call.1} parent=0 // pred_check
    _
  $region11: #{tpu_custom_call.1} parent=0 // pred_check_branch
    %14 = sbr.rel (0) target = $region13
  $region12: #{tpu_custom_call.1} parent=0 // pred_region
    _
  $region13: #{tpu_custom_call.1} parent=0 // pred_fallthru
    _
  // Predicated region
  $region14: #{tpu_custom_call.1} parent=0 // pred_check
    _
  $region15: #{tpu_custom_call.1} parent=0 // pred_check_branch
    %16 = sbr.rel (0) target = $region17
  $region16: #{tpu_custom_call.1} parent=0 // pred_region
    _
  $region17: #{tpu_custom_call.1} parent=0 // pred_fallthru
    _
  %v17 = vld [vmem:[%s0 + $0x20] sm:$0xff]
  %v18 = vld [vmem:[%s0 + $0x28] sm:$0xff]
  %v19 = vld [vmem:[%s1] sm:$0xff]
  %v20 = vld [vmem:[%s1 + $0x8] sm:$0xff]
  %v21 = vld [vmem:[%s2] sm:$0x3]
  %v22 = vld [vmem:[%s2 + $0x8] sm:$0x3]
  %vm23 = vcmask 15360
  %v25 = vsel %vm23, %v19, 0
  %v28 = vsel %vm23, %v20, 0
  %vm30 = vcmask 1041408
  %v32 = vsel %vm30, %v22, 0
  %34 = vmatprep.subr.mxu0 0.0
  %35 = vmatpush1.msra.mxu0 %v32
  %36 = vmatprep.subr.mxu0 0.0
  %37 = vmatpush1.msra.mxu0 0.0
  %38 = vmatprep.subr.mxu0 0.0
  %39 = vmatpush1.msra.mxu0 0.0
  %40 = vmatprep.subr.mxu0 0.0
  %41 = vmatpush1.msra.mxu0 0.0
  %42 = vmatprep.subr.mxu0 0.0
  %43 = vmatpush1.msra.mxu0 0.0
  %44 = vmatprep.subr.mxu0 0.0
  %45 = vmatpush1.msra.mxu0 0.0
  %46 = vmatprep.subr.mxu0 0.0
  %47 = vmatpush1.msra.mxu0 0.0
  %48 = vmatprep.subr.mxu0 0.0
  %49 = vmatpush1.msra.mxu0 0.0
  %50 = vmatprep.subr.mxu0 0.0
  %51 = vmatpush1.msra.mxu0 0.0
  %52 = vmatprep.subr.mxu0 0.0
  %53 = vmatpush1.msra.mxu0 0.0
  %54 = vmatprep.subr.mxu0 0.0
  %55 = vmatpush1.msra.mxu0 0.0
  %56 = vmatprep.subr.mxu0 0.0
  %57 = vmatpush1.msra.mxu0 0.0
  %58 = vmatprep.subr.mxu0 0.0
  %59 = vmatpush1.msra.mxu0 0.0
  %60 = vmatprep.subr.mxu0 0.0
  %61 = vmatpush1.msra.mxu0 0.0
  %62 = vmatprep.subr.mxu0 0.0
  %63 = vmatpush1.msra.mxu0 0.0
  %64 = vmatprep.subr.mxu0 0.0
  %65 = vmatpush1.msra.mxu0 0.0
  %66 = vmatprep.subr.mxu0 0.0
  %67 = vmatpush1.msra.mxu0 0.0
  %68 = vmatprep.subr.mxu0 0.0
  %69 = vmatpush1.msra.mxu0 0.0
  %70 = vmatprep.subr.mxu0 0.0
  %71 = vmatpush1.msra.mxu0 0.0
  %72 = vmatprep.subr.mxu0 0.0
  %73 = vmatpush1.msra.mxu0 0.0
  %74 = vmatprep.subr.mxu0 0.0
  %75 = vmatpush1.msra.mxu0 0.0
  %76 = vmatprep.subr.mxu0 0.0
  %77 = vmatpush1.msra.mxu0 0.0
  %78 = vmatprep.subr.mxu0 0.0
  %79 = vmatpush1.msra.mxu0 0.0
  %80 = vmatprep.subr.mxu0 0.0
  %81 = vmatpush1.msra.mxu0 0.0
  %82 = vmatprep.subr.mxu0 0.0
  %83 = vmatpush1.msra.mxu0 0.0
  %84 = vmatprep.subr.mxu0 0.0
  %85 = vmatpush1.msra.mxu0 0.0
  %86 = vmatprep.subr.mxu0 0.0
  %87 = vmatpush1.msra.mxu0 0.0
  %88 = vmatprep.subr.mxu0 0.0
  %89 = vmatpush1.msra.mxu0 0.0
  %90 = vmatprep.subr.mxu0 0.0
  %91 = vmatpush1.msra.mxu0 0.0
  %92 = vmatprep.subr.mxu0 0.0
  %93 = vmatpush1.msra.mxu0 0.0
  %94 = vmatprep.subr.mxu0 0.0
  %95 = vmatpush1.msra.mxu0 0.0
  %96 = vmatprep.subr.mxu0 0.0
  %97 = vmatpush1.msra.mxu0 0.0
  %98 = vmatprep.mubr.f32.mxu0 0.0
  %99 = vmatmul.mubr.f32.gmra.mrb[0].mxu0 %v25
  %v100 = vpop.f32.mrb[0].mxu0
  %v101 = vadd.f32 0.0, %v100
  %v102 = vpop.f32.mrb[0].mxu0
  %103 = vmatprep.mubr.f32.mxu0 0.0
  %104 = vmatmul.mubr.f32.gmra.mrb[0].mxu0 %v28
  %v105 = vpop.f32.mrb[0].mxu0
  %v106 = vadd.f32 0.0, %v105
  %v107 = vpop.f32.mrb[0].mxu0
  %108 = vdwg.mxu0
  %v110 = vsel %vm23, %v17, 0
  %v113 = vsel %vm23, %v18, 0
  %v116 = vsel %vm30, %v21, 0
  %118 = vmatprep.subr.mxu0 0.0
  %119 = vmatpush1.msra.mxu0 %v116
  %120 = vmatprep.subr.mxu0 0.0
  %121 = vmatpush1.msra.mxu0 0.0
  %122 = vmatprep.subr.mxu0 0.0
  %123 = vmatpush1.msra.mxu0 0.0
  %124 = vmatprep.subr.mxu0 0.0
  %125 = vmatpush1.msra.mxu0 0.0
  %126 = vmatprep.subr.mxu0 0.0
  %127 = vmatpush1.msra.mxu0 0.0
  %128 = vmatprep.subr.mxu0 0.0
  %129 = vmatpush1.msra.mxu0 0.0
  %130 = vmatprep.subr.mxu0 0.0
  %131 = vmatpush1.msra.mxu0 0.0
  %132 = vmatprep.subr.mxu0 0.0
  %133 = vmatpush1.msra.mxu0 0.0
  %134 = vmatprep.subr.mxu0 0.0
  %135 = vmatpush1.msra.mxu0 0.0
  %136 = vmatprep.subr.mxu0 0.0
  %137 = vmatpush1.msra.mxu0 0.0
  %138 = vmatprep.subr.mxu0 0.0
  %139 = vmatpush1.msra.mxu0 0.0
  %140 = vmatprep.subr.mxu0 0.0
  %141 = vmatpush1.msra.mxu0 0.0
  %142 = vmatprep.subr.mxu0 0.0
  %143 = vmatpush1.msra.mxu0 0.0
  %144 = vmatprep.subr.mxu0 0.0
  %145 = vmatpush1.msra.mxu0 0.0
  %146 = vmatprep.subr.mxu0 0.0
  %147 = vmatpush1.msra.mxu0 0.0
  %148 = vmatprep.subr.mxu0 0.0
  %149 = vmatpush1.msra.mxu0 0.0
  %150 = vmatprep.subr.mxu0 0.0
  %151 = vmatpush1.msra.mxu0 0.0
  %152 = vmatprep.subr.mxu0 0.0
  %153 = vmatpush1.msra.mxu0 0.0
  %154 = vmatprep.subr.mxu0 0.0
  %155 = vmatpush1.msra.mxu0 0.0
  %156 = vmatprep.subr.mxu0 0.0
  %157 = vmatpush1.msra.mxu0 0.0
  %158 = vmatprep.subr.mxu0 0.0
  %159 = vmatpush1.msra.mxu0 0.0
  %160 = vmatprep.subr.mxu0 0.0
  %161 = vmatpush1.msra.mxu0 0.0
  %162 = vmatprep.subr.mxu0 0.0
  %163 = vmatpush1.msra.mxu0 0.0
  %164 = vmatprep.subr.mxu0 0.0
  %165 = vmatpush1.msra.mxu0 0.0
  %166 = vmatprep.subr.mxu0 0.0
  %167 = vmatpush1.msra.mxu0 0.0
  %168 = vmatprep.subr.mxu0 0.0
  %169 = vmatpush1.msra.mxu0 0.0
  %170 = vmatprep.subr.mxu0 0.0
  %171 = vmatpush1.msra.mxu0 0.0
  %172 = vmatprep.subr.mxu0 0.0
  %173 = vmatpush1.msra.mxu0 0.0
  %174 = vmatprep.subr.mxu0 0.0
  %175 = vmatpush1.msra.mxu0 0.0
  %176 = vmatprep.subr.mxu0 0.0
  %177 = vmatpush1.msra.mxu0 0.0
  %178 = vmatprep.subr.mxu0 0.0
  %179 = vmatpush1.msra.mxu0 0.0
  %180 = vmatprep.subr.mxu0 0.0
  %181 = vmatpush1.msra.mxu0 0.0
  %182 = vmatprep.mubr.f32.mxu0 0.0
  %183 = vmatmul.mubr.f32.gmra.mrb[0].mxu0 %v110
  %v184 = vpop.f32.mrb[0].mxu0
  %v185 = vadd.f32 %v101, %v184
  %v186 = vpop.f32.mrb[0].mxu0
  %187 = vmatprep.mubr.f32.mxu0 0.0
  %188 = vmatmul.mubr.f32.gmra.mrb[0].mxu0 %v113
  %v189 = vpop.f32.mrb[0].mxu0
  %v190 = vadd.f32 %v106, %v189
  %v191 = vpop.f32.mrb[0].mxu0
  %192 = vdwg.mxu0
  %v193 = vld [vmem:[%s2 + $0x10] sm:$0x1]
  %v194 = vlaneseq
  %v195 = vshrl.u32 %v194, 7
  %v196 = vsub.s32 0, %v195
  %v197 = vrot.slane %v193, %v196
  %v198 = vadd.f32 %v185, %v197
  %v199 = vadd.f32 %v190, %v197
  %v200 = vmax.f32 %v198, 0.0
  %v201 = vmax.f32 %v199, 0.0
  %v202 = vld [vmem:[%s2 + $0x18] sm:$0xff]
  %v203 = vld [vmem:[%s2 + $0x20] sm:$0xff]
  %v204 = vld [vmem:[%s2 + $0x28] sm:$0xff]
  %v205 = vld [vmem:[%s2 + $0x30] sm:$0xff]
  %v206 = vld [vmem:[%s2 + $0x38] sm:$0x1]
  %v207 = vlaneseq
  %v208 = vshrl.u32 %v207, 7
  %v209 = vsub.s32 0, %v208
  %v210 = vrot.slane %v206, %v209
  %vm211 = vcmask 261120
  %v213 = vsel %vm211, %v200, 0
  %v216 = vsel %vm211, %v201, 0
  %218 = vmatprep.subr.mxu0 0.0
  %219 = vmatpush1.msra.mxu0 %v202
  %220 = vmatprep.subr.mxu0 0.0
  %221 = vmatpush1.msra.mxu0 %v203
  %222 = vmatprep.subr.mxu0 0.0
  %223 = vmatpush1.msra.mxu0 %v204
  %224 = vmatprep.subr.mxu0 0.0
  %225 = vmatpush1.msra.mxu0 %v205
  %226 = vmatprep.subr.mxu0 0.0
  %227 = vmatpush1.msra.mxu0 0.0
  %228 = vmatprep.subr.mxu0 0.0
  %229 = vmatpush1.msra.mxu0 0.0
  %230 = vmatprep.subr.mxu0 0.0
  %231 = vmatpush1.msra.mxu0 0.0
  %232 = vmatprep.subr.mxu0 0.0
  %233 = vmatpush1.msra.mxu0 0.0
  %234 = vmatprep.subr.mxu0 0.0
  %235 = vmatpush1.msra.mxu0 0.0
  %236 = vmatprep.subr.mxu0 0.0
  %237 = vmatpush1.msra.mxu0 0.0
  %238 = vmatprep.subr.mxu0 0.0
  %239 = vmatpush1.msra.mxu0 0.0
  %240 = vmatprep.subr.mxu0 0.0
  %241 = vmatpush1.msra.mxu0 0.0
  %242 = vmatprep.subr.mxu0 0.0
  %243 = vmatpush1.msra.mxu0 0.0
  %244 = vmatprep.subr.mxu0 0.0
  %245 = vmatpush1.msra.mxu0 0.0
  %246 = vmatprep.subr.mxu0 0.0
  %247 = vmatpush1.msra.mxu0 0.0
  %248 = vmatprep.subr.mxu0 0.0
  %249 = vmatpush1.msra.mxu0 0.0
  %250 = vmatprep.subr.mxu0 0.0
  %251 = vmatpush1.msra.mxu0 0.0
  %252 = vmatprep.subr.mxu0 0.0
  %253 = vmatpush1.msra.mxu0 0.0
  %254 = vmatprep.subr.mxu0 0.0
  %255 = vmatpush1.msra.mxu0 0.0
  %256 = vmatprep.subr.mxu0 0.0
  %257 = vmatpush1.msra.mxu0 0.0
  %258 = vmatprep.subr.mxu0 0.0
  %259 = vmatpush1.msra.mxu0 0.0
  %260 = vmatprep.subr.mxu0 0.0
  %261 = vmatpush1.msra.mxu0 0.0
  %262 = vmatprep.subr.mxu0 0.0
  %263 = vmatpush1.msra.mxu0 0.0
  %264 = vmatprep.subr.mxu0 0.0
  %265 = vmatpush1.msra.mxu0 0.0
  %266 = vmatprep.subr.mxu0 0.0
  %267 = vmatpush1.msra.mxu0 0.0
  %268 = vmatprep.subr.mxu0 0.0
  %269 = vmatpush1.msra.mxu0 0.0
  %270 = vmatprep.subr.mxu0 0.0
  %271 = vmatpush1.msra.mxu0 0.0
  %272 = vmatprep.subr.mxu0 0.0
  %273 = vmatpush1.msra.mxu0 0.0
  %274 = vmatprep.subr.mxu0 0.0
  %275 = vmatpush1.msra.mxu0 0.0
  %276 = vmatprep.subr.mxu0 0.0
  %277 = vmatpush1.msra.mxu0 0.0
  %278 = vmatprep.subr.mxu0 0.0
  %279 = vmatpush1.msra.mxu0 0.0
  %280 = vmatprep.subr.mxu0 0.0
  %281 = vmatpush1.msra.mxu0 0.0
  %282 = vmatprep.mubr.f32.mxu0 0.0
  %283 = vmatmul.mubr.f32.gmra.mrb[0].mxu0 %v213
  %v284 = vpop.f32.mrb[0].mxu0
  %v285 = vadd.f32 %v210, %v284
  %v286 = vpop.f32.mrb[0].mxu0
  %287 = vmatprep.mubr.f32.mxu0 0.0
  %288 = vmatmul.mubr.f32.gmra.mrb[0].mxu0 %v216
  %v289 = vpop.f32.mrb[0].mxu0
  %v290 = vadd.f32 %v210, %v289
  %v291 = vpop.f32.mrb[0].mxu0
  %292 = vdwg.mxu0
  %v293 = vmax.f32 %v285, 0.0
  %v294 = vmax.f32 %v290, 0.0
  %v295 = vld [vmem:[%s2 + $0x40] sm:$0xff]
  %v296 = vld [vmem:[%s2 + $0x48] sm:$0xff]
  %v297 = vld [vmem:[%s2 + $0x50] sm:$0xff]
  %v298 = vld [vmem:[%s2 + $0x58] sm:$0xff]
  %v299 = vld [vmem:[%s2 + $0x60] sm:$0x1]
  %v300 = vlaneseq
  %v301 = vshrl.u32 %v300, 7
  %v302 = vsub.s32 0, %v301
  %v303 = vrot.slane %v299, %v302
  %v305 = vsel %vm211, %v293, 0
  %v308 = vsel %vm211, %v294, 0
  %310 = vmatprep.subr.mxu0 0.0
  %311 = vmatpush1.msra.mxu0 %v295
  %312 = vmatprep.subr.mxu0 0.0
  %313 = vmatpush1.msra.mxu0 %v296
  %314 = vmatprep.subr.mxu0 0.0
  %315 = vmatpush1.msra.mxu0 %v297
  %316 = vmatprep.subr.mxu0 0.0
  %317 = vmatpush1.msra.mxu0 %v298
  %318 = vmatprep.subr.mxu0 0.0
  %319 = vmatpush1.msra.mxu0 0.0
  %320 = vmatprep.subr.mxu0 0.0
  %321 = vmatpush1.msra.mxu0 0.0
  %322 = vmatprep.subr.mxu0 0.0
  %323 = vmatpush1.msra.mxu0 0.0
  %324 = vmatprep.subr.mxu0 0.0
  %325 = vmatpush1.msra.mxu0 0.0
  %326 = vmatprep.subr.mxu0 0.0
  %327 = vmatpush1.msra.mxu0 0.0
  %328 = vmatprep.subr.mxu0 0.0
  %329 = vmatpush1.msra.mxu0 0.0
  %330 = vmatprep.subr.mxu0 0.0
  %331 = vmatpush1.msra.mxu0 0.0
  %332 = vmatprep.subr.mxu0 0.0
  %333 = vmatpush1.msra.mxu0 0.0
  %334 = vmatprep.subr.mxu0 0.0
  %335 = vmatpush1.msra.mxu0 0.0
  %336 = vmatprep.subr.mxu0 0.0
  %337 = vmatpush1.msra.mxu0 0.0
  %338 = vmatprep.subr.mxu0 0.0
  %339 = vmatpush1.msra.mxu0 0.0
  %340 = vmatprep.subr.mxu0 0.0
  %341 = vmatpush1.msra.mxu0 0.0
  %342 = vmatprep.subr.mxu0 0.0
  %343 = vmatpush1.msra.mxu0 0.0
  %344 = vmatprep.subr.mxu0 0.0
  %345 = vmatpush1.msra.mxu0 0.0
  %346 = vmatprep.subr.mxu0 0.0
  %347 = vmatpush1.msra.mxu0 0.0
  %348 = vmatprep.subr.mxu0 0.0
  %349 = vmatpush1.msra.mxu0 0.0
  %350 = vmatprep.subr.mxu0 0.0
  %351 = vmatpush1.msra.mxu0 0.0
  %352 = vmatprep.subr.mxu0 0.0
  %353 = vmatpush1.msra.mxu0 0.0
  %354 = vmatprep.subr.mxu0 0.0
  %355 = vmatpush1.msra.mxu0 0.0
  %356 = vmatprep.subr.mxu0 0.0
  %357 = vmatpush1.msra.mxu0 0.0
  %358 = vmatprep.subr.mxu0 0.0
  %359 = vmatpush1.msra.mxu0 0.0
  %360 = vmatprep.subr.mxu0 0.0
  %361 = vmatpush1.msra.mxu0 0.0
  %362 = vmatprep.subr.mxu0 0.0
  %363 = vmatpush1.msra.mxu0 0.0
  %364 = vmatprep.subr.mxu0 0.0
  %365 = vmatpush1.msra.mxu0 0.0
  %366 = vmatprep.subr.mxu0 0.0
  %367 = vmatpush1.msra.mxu0 0.0
  %368 = vmatprep.subr.mxu0 0.0
  %369 = vmatpush1.msra.mxu0 0.0
  %370 = vmatprep.subr.mxu0 0.0
  %371 = vmatpush1.msra.mxu0 0.0
  %372 = vmatprep.subr.mxu0 0.0
  %373 = vmatpush1.msra.mxu0 0.0
  %374 = vmatprep.mubr.f32.mxu0 0.0
  %375 = vmatmul.mubr.f32.gmra.mrb[0].mxu0 %v305
  %v376 = vpop.f32.mrb[0].mxu0
  %v377 = vadd.f32 %v303, %v376
  %v378 = vpop.f32.mrb[0].mxu0
  %379 = vmatprep.mubr.f32.mxu0 0.0
  %380 = vmatmul.mubr.f32.gmra.mrb[0].mxu0 %v308
  %v381 = vpop.f32.mrb[0].mxu0
  %v382 = vadd.f32 %v303, %v381
  %v383 = vpop.f32.mrb[0].mxu0
  %384 = vdwg.mxu0
  %v385 = vld [vmem:[%s3] sm:$0x3]
  %vm386 = vcmask 130048
  %v388 = vsel %vm386, %v385, 0
  %390 = vmatprep.subr.mxu0 0.0
  %391 = vmatpush1.msra.mxu0 %v377
  %392 = vmatprep.subr.mxu0 0.0
  %393 = vmatpush1.msra.mxu0 %v382
  %394 = vmatprep.subr.mxu0 0.0
  %395 = vmatpush1.msra.mxu0 0.0
  %396 = vmatprep.subr.mxu0 0.0
  %397 = vmatpush1.msra.mxu0 0.0
  %398 = vmatprep.subr.mxu0 0.0
  %399 = vmatpush1.msra.mxu0 0.0
  %400 = vmatprep.subr.mxu0 0.0
  %401 = vmatpush1.msra.mxu0 0.0
  %402 = vmatprep.subr.mxu0 0.0
  %403 = vmatpush1.msra.mxu0 0.0
  %404 = vmatprep.subr.mxu0 0.0
  %405 = vmatpush1.msra.mxu0 0.0
  %406 = vmatprep.subr.mxu0 0.0
  %407 = vmatpush1.msra.mxu0 0.0
  %408 = vmatprep.subr.mxu0 0.0
  %409 = vmatpush1.msra.mxu0 0.0
  %410 = vmatprep.subr.mxu0 0.0
  %411 = vmatpush1.msra.mxu0 0.0
  %412 = vmatprep.subr.mxu0 0.0
  %413 = vmatpush1.msra.mxu0 0.0
  %414 = vmatprep.subr.mxu0 0.0
  %415 = vmatpush1.msra.mxu0 0.0
  %416 = vmatprep.subr.mxu0 0.0
  %417 = vmatpush1.msra.mxu0 0.0
  %418 = vmatprep.subr.mxu0 0.0
  %419 = vmatpush1.msra.mxu0 0.0
  %420 = vmatprep.subr.mxu0 0.0
  %421 = vmatpush1.msra.mxu0 0.0
  %422 = vmatprep.subr.mxu0 0.0
  %423 = vmatpush1.msra.mxu0 0.0
  %424 = vmatprep.subr.mxu0 0.0
  %425 = vmatpush1.msra.mxu0 0.0
  %426 = vmatprep.subr.mxu0 0.0
  %427 = vmatpush1.msra.mxu0 0.0
  %428 = vmatprep.subr.mxu0 0.0
  %429 = vmatpush1.msra.mxu0 0.0
  %430 = vmatprep.subr.mxu0 0.0
  %431 = vmatpush1.msra.mxu0 0.0
  %432 = vmatprep.subr.mxu0 0.0
  %433 = vmatpush1.msra.mxu0 0.0
  %434 = vmatprep.subr.mxu0 0.0
  %435 = vmatpush1.msra.mxu0 0.0
  %436 = vmatprep.subr.mxu0 0.0
  %437 = vmatpush1.msra.mxu0 0.0
  %438 = vmatprep.subr.mxu0 0.0
  %439 = vmatpush1.msra.mxu0 0.0
  %440 = vmatprep.subr.mxu0 0.0
  %441 = vmatpush1.msra.mxu0 0.0
  %442 = vmatprep.subr.mxu0 0.0
  %443 = vmatpush1.msra.mxu0 0.0
  %444 = vmatprep.subr.mxu0 0.0
  %445 = vmatpush1.msra.mxu0 0.0
  %446 = vmatprep.subr.mxu0 0.0
  %447 = vmatpush1.msra.mxu0 0.0
  %448 = vmatprep.subr.mxu0 0.0
  %449 = vmatpush1.msra.mxu0 0.0
  %450 = vmatprep.subr.mxu0 0.0
  %451 = vmatpush1.msra.mxu0 0.0
  %452 = vmatprep.subr.mxu0 0.0
  %453 = vmatpush1.msra.mxu0 0.0
  %454 = vmatprep.mubr.f32.mxu0 0.0
  %455 = vmatmul.mubr.f32.gmra.mrb[0].mxu0 %v388
  %v456 = vpop.f32.mrb[0].mxu0
  %v457 = vadd.f32 0.0, %v456
  %v458 = vpop.f32.mrb[0].mxu0
  %459 = vdwg.mxu0
  %v460 = vld [vmem:[%s2 + $0x68] sm:$0xff]
  %v461 = vld [vmem:[%s2 + $0x70] sm:$0xff]
  %v462 = vld [vmem:[%s2 + $0x78] sm:$0xff]
  %v463 = vld [vmem:[%s2 + $0x80] sm:$0xff]
  %v464 = vld [vmem:[%s2 + $0x88] sm:$0x1]
  %v465 = vlaneseq
  %v466 = vshrl.u32 %v465, 7
  %v467 = vsub.s32 0, %v466
  %v468 = vrot.slane %v464, %v467
  %v470 = vsel %vm211, %v457, 0
  %472 = vmatprep.subr.mxu0 0.0
  %473 = vmatpush1.msra.mxu0 %v460
  %474 = vmatprep.subr.mxu0 0.0
  %475 = vmatpush1.msra.mxu0 %v461
  %476 = vmatprep.subr.mxu0 0.0
  %477 = vmatpush1.msra.mxu0 %v462
  %478 = vmatprep.subr.mxu0 0.0
  %479 = vmatpush1.msra.mxu0 %v463
  %480 = vmatprep.subr.mxu0 0.0
  %481 = vmatpush1.msra.mxu0 0.0
  %482 = vmatprep.subr.mxu0 0.0
  %483 = vmatpush1.msra.mxu0 0.0
  %484 = vmatprep.subr.mxu0 0.0
  %485 = vmatpush1.msra.mxu0 0.0
  %486 = vmatprep.subr.mxu0 0.0
  %487 = vmatpush1.msra.mxu0 0.0
  %488 = vmatprep.subr.mxu0 0.0
  %489 = vmatpush1.msra.mxu0 0.0
  %490 = vmatprep.subr.mxu0 0.0
  %491 = vmatpush1.msra.mxu0 0.0
  %492 = vmatprep.subr.mxu0 0.0
  %493 = vmatpush1.msra.mxu0 0.0
  %494 = vmatprep.subr.mxu0 0.0
  %495 = vmatpush1.msra.mxu0 0.0
  %496 = vmatprep.subr.mxu0 0.0
  %497 = vmatpush1.msra.mxu0 0.0
  %498 = vmatprep.subr.mxu0 0.0
  %499 = vmatpush1.msra.mxu0 0.0
  %500 = vmatprep.subr.mxu0 0.0
  %501 = vmatpush1.msra.mxu0 0.0
  %502 = vmatprep.subr.mxu0 0.0
  %503 = vmatpush1.msra.mxu0 0.0
  %504 = vmatprep.subr.mxu0 0.0
  %505 = vmatpush1.msra.mxu0 0.0
  %506 = vmatprep.subr.mxu0 0.0
  %507 = vmatpush1.msra.mxu0 0.0
  %508 = vmatprep.subr.mxu0 0.0
  %509 = vmatpush1.msra.mxu0 0.0
  %510 = vmatprep.subr.mxu0 0.0
  %511 = vmatpush1.msra.mxu0 0.0
  %512 = vmatprep.subr.mxu0 0.0
  %513 = vmatpush1.msra.mxu0 0.0
  %514 = vmatprep.subr.mxu0 0.0
  %515 = vmatpush1.msra.mxu0 0.0
  %516 = vmatprep.subr.mxu0 0.0
  %517 = vmatpush1.msra.mxu0 0.0
  %518 = vmatprep.subr.mxu0 0.0
  %519 = vmatpush1.msra.mxu0 0.0
  %520 = vmatprep.subr.mxu0 0.0
  %521 = vmatpush1.msra.mxu0 0.0
  %522 = vmatprep.subr.mxu0 0.0
  %523 = vmatpush1.msra.mxu0 0.0
  %524 = vmatprep.subr.mxu0 0.0
  %525 = vmatpush1.msra.mxu0 0.0
  %526 = vmatprep.subr.mxu0 0.0
  %527 = vmatpush1.msra.mxu0 0.0
  %528 = vmatprep.subr.mxu0 0.0
  %529 = vmatpush1.msra.mxu0 0.0
  %530 = vmatprep.subr.mxu0 0.0
  %531 = vmatpush1.msra.mxu0 0.0
  %532 = vmatprep.subr.mxu0 0.0
  %533 = vmatpush1.msra.mxu0 0.0
  %534 = vmatprep.subr.mxu0 0.0
  %535 = vmatpush1.msra.mxu0 0.0
  %536 = vmatprep.mubr.f32.mxu0 0.0
  %537 = vmatmul.mubr.f32.gmra.mrb[0].mxu0 %v470
  %v538 = vpop.f32.mrb[0].mxu0
  %v539 = vadd.f32 %v468, %v538
  %v540 = vpop.f32.mrb[0].mxu0
  %541 = vdwg.mxu0
  %v542 = vmax.f32 %v539, 0.0
  %v543 = vld [vmem:[%s2 + $0x90] sm:$0xff]
  %v544 = vld [vmem:[%s2 + $0x98] sm:$0xff]
  %v545 = vld [vmem:[%s2 + $0xa0] sm:$0xff]
  %v546 = vld [vmem:[%s2 + $0xa8] sm:$0xff]
  %v547 = vld [vmem:[%s2 + $0xb0] sm:$0x1]
  %v548 = vlaneseq
  %v549 = vshrl.u32 %v548, 7
  %v550 = vsub.s32 0, %v549
  %v551 = vrot.slane %v547, %v550
  %v553 = vsel %vm211, %v542, 0
  %555 = vmatprep.subr.mxu0 0.0
  %556 = vmatpush1.msra.mxu0 %v543
  %557 = vmatprep.subr.mxu0 0.0
  %558 = vmatpush1.msra.mxu0 %v544
  %559 = vmatprep.subr.mxu0 0.0
  %560 = vmatpush1.msra.mxu0 %v545
  %561 = vmatprep.subr.mxu0 0.0
  %562 = vmatpush1.msra.mxu0 %v546
  %563 = vmatprep.subr.mxu0 0.0
  %564 = vmatpush1.msra.mxu0 0.0
  %565 = vmatprep.subr.mxu0 0.0
  %566 = vmatpush1.msra.mxu0 0.0
  %567 = vmatprep.subr.mxu0 0.0
  %568 = vmatpush1.msra.mxu0 0.0
  %569 = vmatprep.subr.mxu0 0.0
  %570 = vmatpush1.msra.mxu0 0.0
  %571 = vmatprep.subr.mxu0 0.0
  %572 = vmatpush1.msra.mxu0 0.0
  %573 = vmatprep.subr.mxu0 0.0
  %574 = vmatpush1.msra.mxu0 0.0
  %575 = vmatprep.subr.mxu0 0.0
  %576 = vmatpush1.msra.mxu0 0.0
  %577 = vmatprep.subr.mxu0 0.0
  %578 = vmatpush1.msra.mxu0 0.0
  %579 = vmatprep.subr.mxu0 0.0
  %580 = vmatpush1.msra.mxu0 0.0
  %581 = vmatprep.subr.mxu0 0.0
  %582 = vmatpush1.msra.mxu0 0.0
  %583 = vmatprep.subr.mxu0 0.0
  %584 = vmatpush1.msra.mxu0 0.0
  %585 = vmatprep.subr.mxu0 0.0
  %586 = vmatpush1.msra.mxu0 0.0
  %587 = vmatprep.subr.mxu0 0.0
  %588 = vmatpush1.msra.mxu0 0.0
  %589 = vmatprep.subr.mxu0 0.0
  %590 = vmatpush1.msra.mxu0 0.0
  %591 = vmatprep.subr.mxu0 0.0
  %592 = vmatpush1.msra.mxu0 0.0
  %593 = vmatprep.subr.mxu0 0.0
  %594 = vmatpush1.msra.mxu0 0.0
  %595 = vmatprep.subr.mxu0 0.0
  %596 = vmatpush1.msra.mxu0 0.0
  %597 = vmatprep.subr.mxu0 0.0
  %598 = vmatpush1.msra.mxu0 0.0
  %599 = vmatprep.subr.mxu0 0.0
  %600 = vmatpush1.msra.mxu0 0.0
  %601 = vmatprep.subr.mxu0 0.0
  %602 = vmatpush1.msra.mxu0 0.0
  %603 = vmatprep.subr.mxu0 0.0
  %604 = vmatpush1.msra.mxu0 0.0
  %605 = vmatprep.subr.mxu0 0.0
  %606 = vmatpush1.msra.mxu0 0.0
  %607 = vmatprep.subr.mxu0 0.0
  %608 = vmatpush1.msra.mxu0 0.0
  %609 = vmatprep.subr.mxu0 0.0
  %610 = vmatpush1.msra.mxu0 0.0
  %611 = vmatprep.subr.mxu0 0.0
  %612 = vmatpush1.msra.mxu0 0.0
  %613 = vmatprep.subr.mxu0 0.0
  %614 = vmatpush1.msra.mxu0 0.0
  %615 = vmatprep.subr.mxu0 0.0
  %616 = vmatpush1.msra.mxu0 0.0
  %617 = vmatprep.subr.mxu0 0.0
  %618 = vmatpush1.msra.mxu0 0.0
  %619 = vmatprep.mubr.f32.mxu0 0.0
  %620 = vmatmul.mubr.f32.gmra.mrb[0].mxu0 %v553
  %v621 = vpop.f32.mrb[0].mxu0
  %v622 = vadd.f32 %v551, %v621
  %v623 = vpop.f32.mrb[0].mxu0
  %624 = vdwg.mxu0
  %v625 = vxor.u32 %v622, 2147483648
  %v626 = vmul.f32 %v625, 1.442695
  %v627 = vpow.pop %v626
  %v628 = vadd.f32 %v627, 1.0
  %v629 = vrcp.pop %v628
  %v630 = vmul.f32 1.0, %v629
  %v631 = vmul.f32 %v630, 0.9
  %v632 = vadd.f32 %v631, 0.1
  %v633 = vld [vmem:[%s3 + $0x28] sm:$0x3]
  %635 = vrot.lane.b32.xlu0 %v633, 32
  %v636 = vpop.permute.xlu0 %635
  %v638 = vmul.f32 %v632, %v636
  %640 = vrot.lane.b32.xlu0 %v638, 96
  %v641 = vpop.permute.xlu0 %640
  %v643 = vadd.f32 %v622, %v641
  %v644 = vld [vmem:[%s2 + $0xc0] sm:$0xff]
  %v645 = vld [vmem:[%s2 + $0xc8] sm:$0xff]
  %v646 = vld [vmem:[%s2 + $0xd0] sm:$0xff]
  %v647 = vld [vmem:[%s2 + $0xd8] sm:$0xff]
  %v649 = vsel %vm211, %v643, 0
  %651 = vmatprep.subr.mxu0 0.0
  %652 = vmatpush1.msra.mxu0 %v644
  %653 = vmatprep.subr.mxu0 0.0
  %654 = vmatpush1.msra.mxu0 %v645
  %655 = vmatprep.subr.mxu0 0.0
  %656 = vmatpush1.msra.mxu0 %v646
  %657 = vmatprep.subr.mxu0 0.0
  %658 = vmatpush1.msra.mxu0 %v647
  %659 = vmatprep.subr.mxu0 0.0
  %660 = vmatpush1.msra.mxu0 0.0
  %661 = vmatprep.subr.mxu0 0.0
  %662 = vmatpush1.msra.mxu0 0.0
  %663 = vmatprep.subr.mxu0 0.0
  %664 = vmatpush1.msra.mxu0 0.0
  %665 = vmatprep.subr.mxu0 0.0
  %666 = vmatpush1.msra.mxu0 0.0
  %667 = vmatprep.subr.mxu0 0.0
  %668 = vmatpush1.msra.mxu0 0.0
  %669 = vmatprep.subr.mxu0 0.0
  %670 = vmatpush1.msra.mxu0 0.0
  %671 = vmatprep.subr.mxu0 0.0
  %672 = vmatpush1.msra.mxu0 0.0
  %673 = vmatprep.subr.mxu0 0.0
  %674 = vmatpush1.msra.mxu0 0.0
  %675 = vmatprep.subr.mxu0 0.0
  %676 = vmatpush1.msra.mxu0 0.0
  %677 = vmatprep.subr.mxu0 0.0
  %678 = vmatpush1.msra.mxu0 0.0
  %679 = vmatprep.subr.mxu0 0.0
  %680 = vmatpush1.msra.mxu0 0.0
  %681 = vmatprep.subr.mxu0 0.0
  %682 = vmatpush1.msra.mxu0 0.0
  %683 = vmatprep.subr.mxu0 0.0
  %684 = vmatpush1.msra.mxu0 0.0
  %685 = vmatprep.subr.mxu0 0.0
  %686 = vmatpush1.msra.mxu0 0.0
  %687 = vmatprep.subr.mxu0 0.0
  %688 = vmatpush1.msra.mxu0 0.0
  %689 = vmatprep.subr.mxu0 0.0
  %690 = vmatpush1.msra.mxu0 0.0
  %691 = vmatprep.subr.mxu0 0.0
  %692 = vmatpush1.msra.mxu0 0.0
  %693 = vmatprep.subr.mxu0 0.0
  %694 = vmatpush1.msra.mxu0 0.0
  %695 = vmatprep.subr.mxu0 0.0
  %696 = vmatpush1.msra.mxu0 0.0
  %697 = vmatprep.subr.mxu0 0.0
  %698 = vmatpush1.msra.mxu0 0.0
  %699 = vmatprep.subr.mxu0 0.0
  %700 = vmatpush1.msra.mxu0 0.0
  %701 = vmatprep.subr.mxu0 0.0
  %702 = vmatpush1.msra.mxu0 0.0
  %703 = vmatprep.subr.mxu0 0.0
  %704 = vmatpush1.msra.mxu0 0.0
  %705 = vmatprep.subr.mxu0 0.0
  %706 = vmatpush1.msra.mxu0 0.0
  %707 = vmatprep.subr.mxu0 0.0
  %708 = vmatpush1.msra.mxu0 0.0
  %709 = vmatprep.subr.mxu0 0.0
  %710 = vmatpush1.msra.mxu0 0.0
  %711 = vmatprep.subr.mxu0 0.0
  %712 = vmatpush1.msra.mxu0 0.0
  %713 = vmatprep.subr.mxu0 0.0
  %714 = vmatpush1.msra.mxu0 0.0
  %715 = vmatprep.mubr.f32.mxu0 0.0
  %716 = vmatmul.mubr.f32.gmra.mrb[0].mxu0 %v649
  %v717 = vpop.f32.mrb[0].mxu0
  %v718 = vadd.f32 0.0, %v717
  %v719 = vpop.f32.mrb[0].mxu0
  %720 = vdwg.mxu0
  %v721 = vld [vmem:[%s3 + $0x8] sm:$0xff]
  %v722 = vld [vmem:[%s3 + $0x10] sm:$0xff]
  %v723 = vld [vmem:[%s3 + $0x18] sm:$0xff]
  %v724 = vld [vmem:[%s3 + $0x20] sm:$0xff]
  %v726 = vsel %vm23, %v721, 0
  %v729 = vsel %vm23, %v722, 0
  %v732 = vsel %vm23, %v723, 0
  %v735 = vsel %vm23, %v724, 0
  %v738 = vsel %vm30, %v718, 0
  %740 = vmatprep.subr.mxu0 0.0
  %741 = vmatpush1.msra.mxu0 %v738
  %742 = vmatprep.subr.mxu0 0.0
  %743 = vmatpush1.msra.mxu0 0.0
  %744 = vmatprep.subr.mxu0 0.0
  %745 = vmatpush1.msra.mxu0 0.0
  %746 = vmatprep.subr.mxu0 0.0
  %747 = vmatpush1.msra.mxu0 0.0
  %748 = vmatprep.subr.mxu0 0.0
  %749 = vmatpush1.msra.mxu0 0.0
  %750 = vmatprep.subr.mxu0 0.0
  %751 = vmatpush1.msra.mxu0 0.0
  %752 = vmatprep.subr.mxu0 0.0
  %753 = vmatpush1.msra.mxu0 0.0
  %754 = vmatprep.subr.mxu0 0.0
  %755 = vmatpush1.msra.mxu0 0.0
  %756 = vmatprep.subr.mxu0 0.0
  %757 = vmatpush1.msra.mxu0 0.0
  %758 = vmatprep.subr.mxu0 0.0
  %759 = vmatpush1.msra.mxu0 0.0
  %760 = vmatprep.subr.mxu0 0.0
  %761 = vmatpush1.msra.mxu0 0.0
  %762 = vmatprep.subr.mxu0 0.0
  %763 = vmatpush1.msra.mxu0 0.0
  %764 = vmatprep.subr.mxu0 0.0
  %765 = vmatpush1.msra.mxu0 0.0
  %766 = vmatprep.subr.mxu0 0.0
  %767 = vmatpush1.msra.mxu0 0.0
  %768 = vmatprep.subr.mxu0 0.0
  %769 = vmatpush1.msra.mxu0 0.0
  %770 = vmatprep.subr.mxu0 0.0
  %771 = vmatpush1.msra.mxu0 0.0
  %772 = vmatprep.subr.mxu0 0.0
  %773 = vmatpush1.msra.mxu0 0.0
  %774 = vmatprep.subr.mxu0 0.0
  %775 = vmatpush1.msra.mxu0 0.0
  %776 = vmatprep.subr.mxu0 0.0
  %777 = vmatpush1.msra.mxu0 0.0
  %778 = vmatprep.subr.mxu0 0.0
  %779 = vmatpush1.msra.mxu0 0.0
  %780 = vmatprep.subr.mxu0 0.0
  %781 = vmatpush1.msra.mxu0 0.0
  %782 = vmatprep.subr.mxu0 0.0
  %783 = vmatpush1.msra.mxu0 0.0
  %784 = vmatprep.subr.mxu0 0.0
  %785 = vmatpush1.msra.mxu0 0.0
  %786 = vmatprep.subr.mxu0 0.0
  %787 = vmatpush1.msra.mxu0 0.0
  %788 = vmatprep.subr.mxu0 0.0
  %789 = vmatpush1.msra.mxu0 0.0
  %790 = vmatprep.subr.mxu0 0.0
  %791 = vmatpush1.msra.mxu0 0.0
  %792 = vmatprep.subr.mxu0 0.0
  %793 = vmatpush1.msra.mxu0 0.0
  %794 = vmatprep.subr.mxu0 0.0
  %795 = vmatpush1.msra.mxu0 0.0
  %796 = vmatprep.subr.mxu0 0.0
  %797 = vmatpush1.msra.mxu0 0.0
  %798 = vmatprep.subr.mxu0 0.0
  %799 = vmatpush1.msra.mxu0 0.0
  %800 = vmatprep.subr.mxu0 0.0
  %801 = vmatpush1.msra.mxu0 0.0
  %802 = vmatprep.subr.mxu0 0.0
  %803 = vmatpush1.msra.mxu0 0.0
  %804 = vmatprep.mubr.f32.mxu0 0.0
  %805 = vmatmul.mubr.f32.gmra.mrb[0].mxu0 %v726
  %v806 = vpop.f32.mrb[0].mxu0
  %v807 = vadd.f32 0.0, %v806
  %v808 = vpop.f32.mrb[0].mxu0
  %809 = vmatprep.mubr.f32.mxu0 0.0
  %810 = vmatmul.mubr.f32.gmra.mrb[0].mxu0 %v729
  %v811 = vpop.f32.mrb[0].mxu0
  %v812 = vadd.f32 0.0, %v811
  %v813 = vpop.f32.mrb[0].mxu0
  %814 = vmatprep.mubr.f32.mxu0 0.0
  %815 = vmatmul.mubr.f32.gmra.mrb[0].mxu0 %v732
  %v816 = vpop.f32.mrb[0].mxu0
  %v817 = vadd.f32 0.0, %v816
  %v818 = vpop.f32.mrb[0].mxu0
  %819 = vmatprep.mubr.f32.mxu0 0.0
  %820 = vmatmul.mubr.f32.gmra.mrb[0].mxu0 %v735
  %v821 = vpop.f32.mrb[0].mxu0
  %v822 = vadd.f32 0.0, %v821
  %v823 = vpop.f32.mrb[0].mxu0
  %824 = vdwg.mxu0
  %v825 = vld [vmem:[%s0] sm:$0xff]
  %v826 = vld [vmem:[%s0 + $0x8] sm:$0xff]
  %v827 = vld [vmem:[%s0 + $0x10] sm:$0xff]
  %v828 = vld [vmem:[%s0 + $0x18] sm:$0xff]
  %v829 = vld [vmem:[%s2 + $0xb8] sm:$0x3]
  %v831 = vsel %vm23, %v825, 0
  %v834 = vsel %vm23, %v826, 0
  %v837 = vsel %vm23, %v827, 0
  %v840 = vsel %vm23, %v828, 0
  %v843 = vsel %vm30, %v829, 0
  %845 = vmatprep.subr.mxu0 0.0
  %846 = vmatpush1.msra.mxu0 %v843
  %847 = vmatprep.subr.mxu0 0.0
  %848 = vmatpush1.msra.mxu0 0.0
  %849 = vmatprep.subr.mxu0 0.0
  %850 = vmatpush1.msra.mxu0 0.0
  %851 = vmatprep.subr.mxu0 0.0
  %852 = vmatpush1.msra.mxu0 0.0
  %853 = vmatprep.subr.mxu0 0.0
  %854 = vmatpush1.msra.mxu0 0.0
  %855 = vmatprep.subr.mxu0 0.0
  %856 = vmatpush1.msra.mxu0 0.0
  %857 = vmatprep.subr.mxu0 0.0
  %858 = vmatpush1.msra.mxu0 0.0
  %859 = vmatprep.subr.mxu0 0.0
  %860 = vmatpush1.msra.mxu0 0.0
  %861 = vmatprep.subr.mxu0 0.0
  %862 = vmatpush1.msra.mxu0 0.0
  %863 = vmatprep.subr.mxu0 0.0
  %864 = vmatpush1.msra.mxu0 0.0
  %865 = vmatprep.subr.mxu0 0.0
  %866 = vmatpush1.msra.mxu0 0.0
  %867 = vmatprep.subr.mxu0 0.0
  %868 = vmatpush1.msra.mxu0 0.0
  %869 = vmatprep.subr.mxu0 0.0
  %870 = vmatpush1.msra.mxu0 0.0
  %871 = vmatprep.subr.mxu0 0.0
  %872 = vmatpush1.msra.mxu0 0.0
  %873 = vmatprep.subr.mxu0 0.0
  %874 = vmatpush1.msra.mxu0 0.0
  %875 = vmatprep.subr.mxu0 0.0
  %876 = vmatpush1.msra.mxu0 0.0
  %877 = vmatprep.subr.mxu0 0.0
  %878 = vmatpush1.msra.mxu0 0.0
  %879 = vmatprep.subr.mxu0 0.0
  %880 = vmatpush1.msra.mxu0 0.0
  %881 = vmatprep.subr.mxu0 0.0
  %882 = vmatpush1.msra.mxu0 0.0
  %883 = vmatprep.subr.mxu0 0.0
  %884 = vmatpush1.msra.mxu0 0.0
  %885 = vmatprep.subr.mxu0 0.0
  %886 = vmatpush1.msra.mxu0 0.0
  %887 = vmatprep.subr.mxu0 0.0
  %888 = vmatpush1.msra.mxu0 0.0
  %889 = vmatprep.subr.mxu0 0.0
  %890 = vmatpush1.msra.mxu0 0.0
  %891 = vmatprep.subr.mxu0 0.0
  %892 = vmatpush1.msra.mxu0 0.0
  %893 = vmatprep.subr.mxu0 0.0
  %894 = vmatpush1.msra.mxu0 0.0
  %895 = vmatprep.subr.mxu0 0.0
  %896 = vmatpush1.msra.mxu0 0.0
  %897 = vmatprep.subr.mxu0 0.0
  %898 = vmatpush1.msra.mxu0 0.0
  %899 = vmatprep.subr.mxu0 0.0
  %900 = vmatpush1.msra.mxu0 0.0
  %901 = vmatprep.subr.mxu0 0.0
  %902 = vmatpush1.msra.mxu0 0.0
  %903 = vmatprep.subr.mxu0 0.0
  %904 = vmatpush1.msra.mxu0 0.0
  %905 = vmatprep.subr.mxu0 0.0
  %906 = vmatpush1.msra.mxu0 0.0
  %907 = vmatprep.subr.mxu0 0.0
  %908 = vmatpush1.msra.mxu0 0.0
  %909 = vmatprep.mubr.f32.mxu0 0.0
  %910 = vmatmul.mubr.f32.gmra.mrb[0].mxu0 %v831
  %v911 = vpop.f32.mrb[0].mxu0
  %v912 = vadd.f32 %v807, %v911
  %v913 = vpop.f32.mrb[0].mxu0
  %914 = vmatprep.mubr.f32.mxu0 0.0
  %915 = vmatmul.mubr.f32.gmra.mrb[0].mxu0 %v834
  %v916 = vpop.f32.mrb[0].mxu0
  %v917 = vadd.f32 %v812, %v916
  %v918 = vpop.f32.mrb[0].mxu0
  %919 = vmatprep.mubr.f32.mxu0 0.0
  %920 = vmatmul.mubr.f32.gmra.mrb[0].mxu0 %v837
  %v921 = vpop.f32.mrb[0].mxu0
  %v922 = vadd.f32 %v817, %v921
  %v923 = vpop.f32.mrb[0].mxu0
  %924 = vmatprep.mubr.f32.mxu0 0.0
  %925 = vmatmul.mubr.f32.gmra.mrb[0].mxu0 %v840
  %v926 = vpop.f32.mrb[0].mxu0
  %v927 = vadd.f32 %v822, %v926
  %v928 = vpop.f32.mrb[0].mxu0
  %929 = vdwg.mxu0
  %v930 = vld [vmem:[%s2 + $0xe0] sm:$0x1]
  %v931 = vlaneseq
  %v932 = vshrl.u32 %v931, 7
  %v933 = vsub.s32 0, %v932
  %v934 = vrot.slane %v930, %v933
  %v935 = vadd.f32 %v912, %v934
  %v936 = vadd.f32 %v917, %v934
  %v937 = vadd.f32 %v922, %v934
  %v938 = vadd.f32 %v927, %v934
  %v939 = vmax.f32 %v935, 0.0
  %v940 = vmax.f32 %v936, 0.0
  %v941 = vmax.f32 %v937, 0.0
  %v942 = vmax.f32 %v938, 0.0
  %v943 = vld [vmem:[%s2 + $0xe8] sm:$0xff]
  %v944 = vld [vmem:[%s2 + $0xf0] sm:$0xff]
  %v945 = vld [vmem:[%s2 + $0xf8] sm:$0xff]
  %v946 = vld [vmem:[%s2 + $0x100] sm:$0xff]
  %v947 = vld [vmem:[%s2 + $0x108] sm:$0x1]
  %v948 = vlaneseq
  %v949 = vshrl.u32 %v948, 7
  %v950 = vsub.s32 0, %v949
  %v951 = vrot.slane %v947, %v950
  %v953 = vsel %vm211, %v939, 0
  %v956 = vsel %vm211, %v940, 0
  %v959 = vsel %vm211, %v941, 0
  %v962 = vsel %vm211, %v942, 0
  %964 = vmatprep.subr.mxu0 0.0
  %965 = vmatpush1.msra.mxu0 %v943
  %966 = vmatprep.subr.mxu0 0.0
  %967 = vmatpush1.msra.mxu0 %v944
  %968 = vmatprep.subr.mxu0 0.0
  %969 = vmatpush1.msra.mxu0 %v945
  %970 = vmatprep.subr.mxu0 0.0
  %971 = vmatpush1.msra.mxu0 %v946
  %972 = vmatprep.subr.mxu0 0.0
  %973 = vmatpush1.msra.mxu0 0.0
  %974 = vmatprep.subr.mxu0 0.0
  %975 = vmatpush1.msra.mxu0 0.0
  %976 = vmatprep.subr.mxu0 0.0
  %977 = vmatpush1.msra.mxu0 0.0
  %978 = vmatprep.subr.mxu0 0.0
  %979 = vmatpush1.msra.mxu0 0.0
  %980 = vmatprep.subr.mxu0 0.0
  %981 = vmatpush1.msra.mxu0 0.0
  %982 = vmatprep.subr.mxu0 0.0
  %983 = vmatpush1.msra.mxu0 0.0
  %984 = vmatprep.subr.mxu0 0.0
  %985 = vmatpush1.msra.mxu0 0.0
  %986 = vmatprep.subr.mxu0 0.0
  %987 = vmatpush1.msra.mxu0 0.0
  %988 = vmatprep.subr.mxu0 0.0
  %989 = vmatpush1.msra.mxu0 0.0
  %990 = vmatprep.subr.mxu0 0.0
  %991 = vmatpush1.msra.mxu0 0.0
  %992 = vmatprep.subr.mxu0 0.0
  %993 = vmatpush1.msra.mxu0 0.0
  %994 = vmatprep.subr.mxu0 0.0
  %995 = vmatpush1.msra.mxu0 0.0
  %996 = vmatprep.subr.mxu0 0.0
  %997 = vmatpush1.msra.mxu0 0.0
  %998 = vmatprep.subr.mxu0 0.0
  %999 = vmatpush1.msra.mxu0 0.0
  %1000 = vmatprep.subr.mxu0 0.0
  %1001 = vmatpush1.msra.mxu0 0.0
  %1002 = vmatprep.subr.mxu0 0.0
  %1003 = vmatpush1.msra.mxu0 0.0
  %1004 = vmatprep.subr.mxu0 0.0
  %1005 = vmatpush1.msra.mxu0 0.0
  %1006 = vmatprep.subr.mxu0 0.0
  %1007 = vmatpush1.msra.mxu0 0.0
  %1008 = vmatprep.subr.mxu0 0.0
  %1009 = vmatpush1.msra.mxu0 0.0
  %1010 = vmatprep.subr.mxu0 0.0
  %1011 = vmatpush1.msra.mxu0 0.0
  %1012 = vmatprep.subr.mxu0 0.0
  %1013 = vmatpush1.msra.mxu0 0.0
  %1014 = vmatprep.subr.mxu0 0.0
  %1015 = vmatpush1.msra.mxu0 0.0
  %1016 = vmatprep.subr.mxu0 0.0
  %1017 = vmatpush1.msra.mxu0 0.0
  %1018 = vmatprep.subr.mxu0 0.0
  %1019 = vmatpush1.msra.mxu0 0.0
  %1020 = vmatprep.subr.mxu0 0.0
  %1021 = vmatpush1.msra.mxu0 0.0
  %1022 = vmatprep.subr.mxu0 0.0
  %1023 = vmatpush1.msra.mxu0 0.0
  %1024 = vmatprep.subr.mxu0 0.0
  %1025 = vmatpush1.msra.mxu0 0.0
  %1026 = vmatprep.subr.mxu0 0.0
  %1027 = vmatpush1.msra.mxu0 0.0
  %1028 = vmatprep.mubr.f32.mxu0 0.0
  %1029 = vmatmul.mubr.f32.gmra.mrb[0].mxu0 %v953
  %v1030 = vpop.f32.mrb[0].mxu0
  %v1031 = vadd.f32 %v951, %v1030
  %v1032 = vpop.f32.mrb[0].mxu0
  %1033 = vmatprep.mubr.f32.mxu0 0.0
  %1034 = vmatmul.mubr.f32.gmra.mrb[0].mxu0 %v956
  %v1035 = vpop.f32.mrb[0].mxu0
  %v1036 = vadd.f32 %v951, %v1035
  %v1037 = vpop.f32.mrb[0].mxu0
  %1038 = vmatprep.mubr.f32.mxu0 0.0
  %1039 = vmatmul.mubr.f32.gmra.mrb[0].mxu0 %v959
  %v1040 = vpop.f32.mrb[0].mxu0
  %v1041 = vadd.f32 %v951, %v1040
  %v1042 = vpop.f32.mrb[0].mxu0
  %1043 = vmatprep.mubr.f32.mxu0 0.0
  %1044 = vmatmul.mubr.f32.gmra.mrb[0].mxu0 %v962
  %v1045 = vpop.f32.mrb[0].mxu0
  %v1046 = vadd.f32 %v951, %v1045
  %v1047 = vpop.f32.mrb[0].mxu0
  %1048 = vdwg.mxu0
  %v1049 = vmax.f32 %v1031, 0.0
  %v1050 = vmax.f32 %v1036, 0.0
  %v1051 = vmax.f32 %v1041, 0.0
  %v1052 = vmax.f32 %v1046, 0.0
  %v1053 = vld [vmem:[%s2 + $0x110] sm:$0xff]
  %v1054 = vld [vmem:[%s2 + $0x118] sm:$0xff]
  %v1055 = vld [vmem:[%s2 + $0x120] sm:$0xff]
  %v1056 = vld [vmem:[%s2 + $0x128] sm:$0xff]
  %v1057 = vld [vmem:[%s2 + $0x130] sm:$0x1]
  %v1058 = vlaneseq
  %v1059 = vshrl.u32 %v1058, 7
  %v1060 = vsub.s32 0, %v1059
  %v1061 = vrot.slane %v1057, %v1060
  %v1063 = vsel %vm211, %v1049, 0
  %v1066 = vsel %vm211, %v1050, 0
  %v1069 = vsel %vm211, %v1051, 0
  %v1072 = vsel %vm211, %v1052, 0
  %1074 = vmatprep.subr.mxu0 0.0
  %1075 = vmatpush1.msra.mxu0 %v1053
  %1076 = vmatprep.subr.mxu0 0.0
  %1077 = vmatpush1.msra.mxu0 %v1054
  %1078 = vmatprep.subr.mxu0 0.0
  %1079 = vmatpush1.msra.mxu0 %v1055
  %1080 = vmatprep.subr.mxu0 0.0
  %1081 = vmatpush1.msra.mxu0 %v1056
  %1082 = vmatprep.subr.mxu0 0.0
  %1083 = vmatpush1.msra.mxu0 0.0
  %1084 = vmatprep.subr.mxu0 0.0
  %1085 = vmatpush1.msra.mxu0 0.0
  %1086 = vmatprep.subr.mxu0 0.0
  %1087 = vmatpush1.msra.mxu0 0.0
  %1088 = vmatprep.subr.mxu0 0.0
  %1089 = vmatpush1.msra.mxu0 0.0
  %1090 = vmatprep.subr.mxu0 0.0
  %1091 = vmatpush1.msra.mxu0 0.0
  %1092 = vmatprep.subr.mxu0 0.0
  %1093 = vmatpush1.msra.mxu0 0.0
  %1094 = vmatprep.subr.mxu0 0.0
  %1095 = vmatpush1.msra.mxu0 0.0
  %1096 = vmatprep.subr.mxu0 0.0
  %1097 = vmatpush1.msra.mxu0 0.0
  %1098 = vmatprep.subr.mxu0 0.0
  %1099 = vmatpush1.msra.mxu0 0.0
  %1100 = vmatprep.subr.mxu0 0.0
  %1101 = vmatpush1.msra.mxu0 0.0
  %1102 = vmatprep.subr.mxu0 0.0
  %1103 = vmatpush1.msra.mxu0 0.0
  %1104 = vmatprep.subr.mxu0 0.0
  %1105 = vmatpush1.msra.mxu0 0.0
  %1106 = vmatprep.subr.mxu0 0.0
  %1107 = vmatpush1.msra.mxu0 0.0
  %1108 = vmatprep.subr.mxu0 0.0
  %1109 = vmatpush1.msra.mxu0 0.0
  %1110 = vmatprep.subr.mxu0 0.0
  %1111 = vmatpush1.msra.mxu0 0.0
  %1112 = vmatprep.subr.mxu0 0.0
  %1113 = vmatpush1.msra.mxu0 0.0
  %1114 = vmatprep.subr.mxu0 0.0
  %1115 = vmatpush1.msra.mxu0 0.0
  %1116 = vmatprep.subr.mxu0 0.0
  %1117 = vmatpush1.msra.mxu0 0.0
  %1118 = vmatprep.subr.mxu0 0.0
  %1119 = vmatpush1.msra.mxu0 0.0
  %1120 = vmatprep.subr.mxu0 0.0
  %1121 = vmatpush1.msra.mxu0 0.0
  %1122 = vmatprep.subr.mxu0 0.0
  %1123 = vmatpush1.msra.mxu0 0.0
  %1124 = vmatprep.subr.mxu0 0.0
  %1125 = vmatpush1.msra.mxu0 0.0
  %1126 = vmatprep.subr.mxu0 0.0
  %1127 = vmatpush1.msra.mxu0 0.0
  %1128 = vmatprep.subr.mxu0 0.0
  %1129 = vmatpush1.msra.mxu0 0.0
  %1130 = vmatprep.subr.mxu0 0.0
  %1131 = vmatpush1.msra.mxu0 0.0
  %1132 = vmatprep.subr.mxu0 0.0
  %1133 = vmatpush1.msra.mxu0 0.0
  %1134 = vmatprep.subr.mxu0 0.0
  %1135 = vmatpush1.msra.mxu0 0.0
  %1136 = vmatprep.subr.mxu0 0.0
  %1137 = vmatpush1.msra.mxu0 0.0
  %1138 = vmatprep.mubr.f32.mxu0 0.0
  %1139 = vmatmul.mubr.f32.gmra.mrb[0].mxu0 %v1063
  %v1140 = vpop.f32.mrb[0].mxu0
  %v1141 = vadd.f32 %v1061, %v1140
  %v1142 = vpop.f32.mrb[0].mxu0
  %1143 = vmatprep.mubr.f32.mxu0 0.0
  %1144 = vmatmul.mubr.f32.gmra.mrb[0].mxu0 %v1066
  %v1145 = vpop.f32.mrb[0].mxu0
  %v1146 = vadd.f32 %v1061, %v1145
  %v1147 = vpop.f32.mrb[0].mxu0
  %1148 = vmatprep.mubr.f32.mxu0 0.0
  %1149 = vmatmul.mubr.f32.gmra.mrb[0].mxu0 %v1069
  %v1150 = vpop.f32.mrb[0].mxu0
  %v1151 = vadd.f32 %v1061, %v1150
  %v1152 = vpop.f32.mrb[0].mxu0
  %1153 = vmatprep.mubr.f32.mxu0 0.0
  %1154 = vmatmul.mubr.f32.gmra.mrb[0].mxu0 %v1072
  %v1155 = vpop.f32.mrb[0].mxu0
  %v1156 = vadd.f32 %v1061, %v1155
  %v1157 = vpop.f32.mrb[0].mxu0
  %1158 = vdwg.mxu0
  %v1159 = vmax.f32 %v1141, 0.0
  %v1160 = vmax.f32 %v1146, 0.0
  %v1161 = vmax.f32 %v1151, 0.0
  %v1162 = vmax.f32 %v1156, 0.0
  %v1163 = vld [vmem:[%s2 + $0x138] sm:$0xff]
  %v1164 = vld [vmem:[%s2 + $0x140] sm:$0xff]
  %v1165 = vld [vmem:[%s2 + $0x148] sm:$0xff]
  %v1166 = vld [vmem:[%s2 + $0x150] sm:$0xff]
  %v1167 = vld [vmem:[%s2 + $0x158] sm:$0x1]
  %v1168 = vlaneseq
  %v1169 = vshrl.u32 %v1168, 7
  %v1170 = vsub.s32 0, %v1169
  %v1171 = vrot.slane %v1167, %v1170
  %v1173 = vsel %vm211, %v1159, 0
  %v1176 = vsel %vm211, %v1160, 0
  %v1179 = vsel %vm211, %v1161, 0
  %v1182 = vsel %vm211, %v1162, 0
  %1184 = vmatprep.subr.mxu0 0.0
  %1185 = vmatpush1.msra.mxu0 %v1163
  %1186 = vmatprep.subr.mxu0 0.0
  %1187 = vmatpush1.msra.mxu0 %v1164
  %1188 = vmatprep.subr.mxu0 0.0
  %1189 = vmatpush1.msra.mxu0 %v1165
  %1190 = vmatprep.subr.mxu0 0.0
  %1191 = vmatpush1.msra.mxu0 %v1166
  %1192 = vmatprep.subr.mxu0 0.0
  %1193 = vmatpush1.msra.mxu0 0.0
  %1194 = vmatprep.subr.mxu0 0.0
  %1195 = vmatpush1.msra.mxu0 0.0
  %1196 = vmatprep.subr.mxu0 0.0
  %1197 = vmatpush1.msra.mxu0 0.0
  %1198 = vmatprep.subr.mxu0 0.0
  %1199 = vmatpush1.msra.mxu0 0.0
  %1200 = vmatprep.subr.mxu0 0.0
  %1201 = vmatpush1.msra.mxu0 0.0
  %1202 = vmatprep.subr.mxu0 0.0
  %1203 = vmatpush1.msra.mxu0 0.0
  %1204 = vmatprep.subr.mxu0 0.0
  %1205 = vmatpush1.msra.mxu0 0.0
  %1206 = vmatprep.subr.mxu0 0.0
  %1207 = vmatpush1.msra.mxu0 0.0
  %1208 = vmatprep.subr.mxu0 0.0
  %1209 = vmatpush1.msra.mxu0 0.0
  %1210 = vmatprep.subr.mxu0 0.0
  %1211 = vmatpush1.msra.mxu0 0.0
  %1212 = vmatprep.subr.mxu0 0.0
  %1213 = vmatpush1.msra.mxu0 0.0
  %1214 = vmatprep.subr.mxu0 0.0
  %1215 = vmatpush1.msra.mxu0 0.0
  %1216 = vmatprep.subr.mxu0 0.0
  %1217 = vmatpush1.msra.mxu0 0.0
  %1218 = vmatprep.subr.mxu0 0.0
  %1219 = vmatpush1.msra.mxu0 0.0
  %1220 = vmatprep.subr.mxu0 0.0
  %1221 = vmatpush1.msra.mxu0 0.0
  %1222 = vmatprep.subr.mxu0 0.0
  %1223 = vmatpush1.msra.mxu0 0.0
  %1224 = vmatprep.subr.mxu0 0.0
  %1225 = vmatpush1.msra.mxu0 0.0
  %1226 = vmatprep.subr.mxu0 0.0
  %1227 = vmatpush1.msra.mxu0 0.0
  %1228 = vmatprep.subr.mxu0 0.0
  %1229 = vmatpush1.msra.mxu0 0.0
  %1230 = vmatprep.subr.mxu0 0.0
  %1231 = vmatpush1.msra.mxu0 0.0
  %1232 = vmatprep.subr.mxu0 0.0
  %1233 = vmatpush1.msra.mxu0 0.0
  %1234 = vmatprep.subr.mxu0 0.0
  %1235 = vmatpush1.msra.mxu0 0.0
  %1236 = vmatprep.subr.mxu0 0.0
  %1237 = vmatpush1.msra.mxu0 0.0
  %1238 = vmatprep.subr.mxu0 0.0
  %1239 = vmatpush1.msra.mxu0 0.0
  %1240 = vmatprep.subr.mxu0 0.0
  %1241 = vmatpush1.msra.mxu0 0.0
  %1242 = vmatprep.subr.mxu0 0.0
  %1243 = vmatpush1.msra.mxu0 0.0
  %1244 = vmatprep.subr.mxu0 0.0
  %1245 = vmatpush1.msra.mxu0 0.0
  %1246 = vmatprep.subr.mxu0 0.0
  %1247 = vmatpush1.msra.mxu0 0.0
  %1248 = vmatprep.mubr.f32.mxu0 0.0
  %1249 = vmatmul.mubr.f32.gmra.mrb[0].mxu0 %v1173
  %v1250 = vpop.f32.mrb[0].mxu0
  %v1251 = vadd.f32 %v1171, %v1250
  %v1252 = vpop.f32.mrb[0].mxu0
  %1253 = vmatprep.mubr.f32.mxu0 0.0
  %1254 = vmatmul.mubr.f32.gmra.mrb[0].mxu0 %v1176
  %v1255 = vpop.f32.mrb[0].mxu0
  %v1256 = vadd.f32 %v1171, %v1255
  %v1257 = vpop.f32.mrb[0].mxu0
  %1258 = vmatprep.mubr.f32.mxu0 0.0
  %1259 = vmatmul.mubr.f32.gmra.mrb[0].mxu0 %v1179
  %v1260 = vpop.f32.mrb[0].mxu0
  %v1261 = vadd.f32 %v1171, %v1260
  %v1262 = vpop.f32.mrb[0].mxu0
  %1263 = vmatprep.mubr.f32.mxu0 0.0
  %1264 = vmatmul.mubr.f32.gmra.mrb[0].mxu0 %v1182
  %v1265 = vpop.f32.mrb[0].mxu0
  %v1266 = vadd.f32 %v1171, %v1265
  %v1267 = vpop.f32.mrb[0].mxu0
  %1268 = vdwg.mxu0
  %v1269 = vmax.f32 %v1251, 0.0
  %v1270 = vmax.f32 %v1256, 0.0
  %v1271 = vmax.f32 %v1261, 0.0
  %v1272 = vmax.f32 %v1266, 0.0
  %vm1273 = vcmp.ne.f32.partialorder %v1251, %v1251
  %vm1274 = vcmp.ne.f32.partialorder %v1256, %v1256
  %vm1275 = vcmp.ne.f32.partialorder %v1261, %v1261
  %vm1276 = vcmp.ne.f32.partialorder %v1266, %v1266
  %v1277 = vadd.f32 %v1251, 0.0
  %v1278 = vadd.f32 %v1256, 0.0
  %v1279 = vadd.f32 %v1261, 0.0
  %v1280 = vadd.f32 %v1266, 0.0
  %v1281 = vand.u32 2147483647, %v1251
  %v1282 = vand.u32 2147483647, %v1256
  %v1283 = vand.u32 2147483647, %v1261
  %v1284 = vand.u32 2147483647, %v1266
  %v1285 = vsub.f32 0.0, %v1281
  %v1286 = vsub.f32 0.0, %v1282
  %v1287 = vsub.f32 0.0, %v1283
  %v1288 = vsub.f32 0.0, %v1284
  %v1289 = vmul.f32 %v1285, 1.442695
  %v1290 = vpow.pop %v1289
  %v1291 = vmul.f32 %v1286, 1.442695
  %v1292 = vpow.pop %v1291
  %v1293 = vmul.f32 %v1287, 1.442695
  %v1294 = vpow.pop %v1293
  %v1295 = vmul.f32 %v1288, 1.442695
  %v1296 = vpow.pop %v1295
  %v1297 = vadd.f32 %v1290, 1.0
  %v1298 = vlog2.pop %v1297
  %v1299 = vmul.f32 %v1298, 0.6931472
  %v1300 = vmul.f32 -0.5, %v1290
  %v1301 = vadd.f32 %v1300, 1.0
  %v1302 = vmul.f32 %v1301, %v1290
  %v1303 = vand.u32 2147483647, %v1290
  %vm1304 = vcmp.lt.f32.partialorder %v1303, 0.0004427343
  %v1305 = vsel %vm1304, %v1302, %v1299
  %v1306 = vadd.f32 %v1292, 1.0
  %v1307 = vlog2.pop %v1306
  %v1308 = vmul.f32 %v1307, 0.6931472
  %v1309 = vmul.f32 -0.5, %v1292
  %v1310 = vadd.f32 %v1309, 1.0
  %v1311 = vmul.f32 %v1310, %v1292
  %v1312 = vand.u32 2147483647, %v1292
  %vm1313 = vcmp.lt.f32.partialorder %v1312, 0.0004427343
  %v1314 = vsel %vm1313, %v1311, %v1308
  %v1315 = vadd.f32 %v1294, 1.0
  %v1316 = vlog2.pop %v1315
  %v1317 = vmul.f32 %v1316, 0.6931472
  %v1318 = vmul.f32 -0.5, %v1294
  %v1319 = vadd.f32 %v1318, 1.0
  %v1320 = vmul.f32 %v1319, %v1294
  %v1321 = vand.u32 2147483647, %v1294
  %vm1322 = vcmp.lt.f32.partialorder %v1321, 0.0004427343
  %v1323 = vsel %vm1322, %v1320, %v1317
  %v1324 = vadd.f32 %v1296, 1.0
  %v1325 = vlog2.pop %v1324
  %v1326 = vmul.f32 %v1325, 0.6931472
  %v1327 = vmul.f32 -0.5, %v1296
  %v1328 = vadd.f32 %v1327, 1.0
  %v1329 = vmul.f32 %v1328, %v1296
  %v1330 = vand.u32 2147483647, %v1296
  %vm1331 = vcmp.lt.f32.partialorder %v1330, 0.0004427343
  %v1332 = vsel %vm1331, %v1329, %v1326
  %v1333 = vadd.f32 %v1269, %v1305
  %v1334 = vadd.f32 %v1270, %v1314
  %v1335 = vadd.f32 %v1271, %v1323
  %v1336 = vadd.f32 %v1272, %v1332
  %v1337 = vsel %vm1273, %v1277, %v1333
  %v1338 = vsel %vm1274, %v1278, %v1334
  %v1339 = vsel %vm1275, %v1279, %v1335
  %v1340 = vsel %vm1276, %v1280, %v1336
  %v1341 = vmul.f32 %v1337, 0.9
  %v1342 = vmul.f32 %v1338, 0.9
  %v1343 = vmul.f32 %v1339, 0.9
  %v1344 = vmul.f32 %v1340, 0.9
  %v1345 = vadd.f32 %v1341, 0.1
  %v1346 = vadd.f32 %v1342, 0.1
  %v1347 = vadd.f32 %v1343, 0.1
  %v1348 = vadd.f32 %v1344, 0.1
  %v1349 = vlaneseq
  %v1350 = vand.u32 %v1349, 127
  %vm1351 = vcmp.lt.s32.totalorder %v1350, 2
  %v1352 = vsel %vm1351, %v1251, %v1345
  %v1353 = vsel %vm1351, %v1256, %v1346
  %v1354 = vsel %vm1351, %v1261, %v1347
  %v1355 = vsel %vm1351, %v1266, %v1348
  %vm1356 = vcmask 31744
  %1357 = vst.msk [vmem:[%s4] sm:$0xff] %vm1356, %v1352
  %1358 = vst.msk [vmem:[%s4 + $0x8] sm:$0xff] %vm1356, %v1353
  %1359 = vst.msk [vmem:[%s4 + $0x10] sm:$0xff] %vm1356, %v1354
  %1360 = vst.msk [vmem:[%s4 + $0x18] sm:$0xff] %vm1356, %v1355
  // Predicated region
  $region18: #{tpu_custom_call.1} parent=0 // pred_check
    _
  $region19: #{tpu_custom_call.1} parent=0 // pred_check_branch
    %1362 = sbr.rel (0) target = $region21
  $region20: #{tpu_custom_call.1} parent=0 // pred_region
    _
  $region21: #{tpu_custom_call.1} parent=0 // pred_fallthru
    _
  // Predicated region
  $region22: #{tpu_custom_call.1} parent=0 // pred_check
    _
  $region23: #{tpu_custom_call.1} parent=0 // pred_check_branch
    %1364 = sbr.rel (0) target = $region25
  $region24: #{tpu_custom_call.1} parent=0 // pred_region
    _
  $region25: #{tpu_custom_call.1} parent=0 // pred_fallthru
    _

</llo_original>
